<compile_context>
chip_gen: v6e
topology: v6e:2x2x1
jax: 0.10.0
libtpu: 0.0.40
codegen_flags: <defaults>
</compile_context>

<pallas_src>
import functools

import jax
import jax.numpy as jnp
from jax.experimental import pallas as pl
from jax.experimental.pallas import tpu as pltpu


# ----------------------------------------------------------------------------
# Fused kernel: MLP (transposed) + k-step APPNP propagation, all in VMEM.
# ----------------------------------------------------------------------------
def _make_fused_appnp_kernel(n_layers, k, alpha):
    def kernel(*refs):
        # refs = (xT, w1T, b1, w2T, b2, ..., wLT, bL, adj_hat, outT)
        xt_ref = refs[0]
        adj_ref = refs[-2]
        out_ref = refs[-1]

        # ---- MLP, transposed: h has shape (layer_dim, N); N on the lane axis.
        h = xt_ref[...]
        for li in range(n_layers):
            wt_ref = refs[1 + 2 * li]                 # (out, in)
            b_ref = refs[2 + 2 * li]                  # (out, 1)
            h = jnp.dot(wt_ref[...], h, preferred_element_type=jnp.float32)
            h = h + b_ref[...]                        # lane-broadcast bias
            if li < n_layers - 1:
                h = jnp.maximum(h, 0.0)               # ReLU on hidden layers only

        # ---- APPNP propagation:  h_T <- h_T @ [(1-a) A] + a * h0_T,  k times.
        adj_s = (1.0 - alpha) * adj_ref[...]          # hoisted out of the loop
        h0a = alpha * h                               # hoisted out of the loop
        # Fully unrolled at trace time (k static & tiny) -> cross-iteration
        # scheduling visibility for the MXU pushes/pops.
        for _ in range(k):
            h = jnp.dot(h, adj_s, preferred_element_type=jnp.float32) + h0a

        out_ref[...] = h.astype(out_ref.dtype)        # (n_classes, N) lane-dense

    return kernel


def appnp_forward(adj_hat, features, params, *, k, alpha):
    """Fused APPNP forward (inference).  Returns logits of shape (N, n_classes)."""
    n_nodes = features.shape[0]
    n_layers = len(params)
    n_classes = params[-1][0].shape[1]

    # Lane-dense transposed layout: the node axis (multiple of 128 here) sits on
    # the 128-lane minor dimension of every activation block.
    xt = features.T                                   # (F_in, N)
    inputs = [xt]
    in_specs = [pl.BlockSpec(xt.shape, lambda i: (0, 0))]
    for (w, b) in params:
        wt = w.T                                      # (out, in) — torch-native layout
        b2 = b.reshape(-1, 1)                         # broadcast along lanes in-kernel
        inputs += [wt, b2]
        in_specs += [pl.BlockSpec(wt.shape, lambda i: (0, 0)),
                     pl.BlockSpec(b2.shape, lambda i: (0, 0))]
    inputs.append(adj_hat)
    in_specs.append(pl.BlockSpec(adj_hat.shape, lambda i: (0, 0)))

    out_t = pl.pallas_call(
        _make_fused_appnp_kernel(n_layers, k, alpha),
        out_shape=jax.ShapeDtypeStruct((n_classes, n_nodes), jnp.float32),
        grid_spec=pltpu.PrefetchScalarGridSpec(
            num_scalar_prefetch=0,
            grid=(1,),                                # whole graph in one VMEM block
            in_specs=in_specs,
            out_specs=pl.BlockSpec((n_classes, n_nodes), lambda i: (0, 0)),
        ),
        compiler_params=pltpu.CompilerParams(
            dimension_semantics=("arbitrary",),
            # Explicit, generation-portable VMEM budget (v5e scoped default is
            # only 16 MiB; v7x physical is 64 MiB).  Kernel needs ~1 MiB here.
            vmem_limit_bytes=32 * 1024 * 1024,
        ),
    )(*inputs)
    return out_t.T                                    # back to (N, n_classes)


# ----------------------------------------------------------------------------
# Pure-JAX reference (untransposed) for correctness checking.
# ----------------------------------------------------------------------------
def appnp_reference(adj_hat, features, params, *, k, alpha):
    h = features
    for (w, b) in params[:-1]:
        h = jnp.maximum(h @ w + b, 0.0)
    w, b = params[-1]
    h = h @ w + b
    h0 = h
    for _ in range(k):
        h = (1.0 - alpha) * (adj_hat @ h) + alpha * h0
    return h


if __name__ == "__main__":
    key = jax.random.PRNGKey(0)

    # small synthetic problem
    num_nodes = 256
    in_feats = 64
    hiddens = [128, 64]
    n_classes = 16
    alpha = 0.1
    k_steps = 10

    # deterministic parameter init (shapes follow nn.Linear in the module)
    dims = [in_feats] + hiddens + [n_classes]
    params = []
    for li in range(len(dims) - 1):
        key, kw, kb = jax.random.split(key, 3)
        fan_in, fan_out = dims[li], dims[li + 1]
        w = (jax.random.normal(kw, (fan_in, fan_out), jnp.float32)
             * (1.0 / jnp.sqrt(fan_in)))
        b = jax.random.normal(kb, (fan_out,), jnp.float32) * 0.01
        params.append((w, b))

    # deterministic node features
    key, kf = jax.random.split(key)
    features = jax.random.normal(kf, (num_nodes, in_feats), jnp.float32)

    # synthetic undirected graph -> dense symmetrically-normalized adjacency
    key, ka = jax.random.split(key)
    a_rand = jax.random.uniform(ka, (num_nodes, num_nodes))
    adj = (a_rand < 0.05).astype(jnp.float32)
    adj = jnp.maximum(adj, adj.T)                       # symmetrize
    adj = adj + jnp.eye(num_nodes, dtype=jnp.float32)   # ensure no zero-degree nodes
    deg = adj.sum(axis=1)
    d_inv_sqrt = 1.0 / jnp.sqrt(deg)
    adj_hat = d_inv_sqrt[:, None] * adj * d_inv_sqrt[None, :]

    fwd = jax.jit(functools.partial(appnp_forward, k=k_steps, alpha=alpha))
    out = jax.block_until_ready(fwd(adj_hat, features, params))

    ref = appnp_reference(adj_hat, features, params, k=k_steps, alpha=alpha)
    assert out.shape == (num_nodes, n_classes)
    assert jnp.allclose(out, ref, atol=1e-4, rtol=1e-4), "mismatch vs reference"

    print("KERNEL_OK")
</pallas_src>

<mosaic_0001>
module attributes {stable_mosaic.version = 11 : i64} {
  func.func @kernel(%arg0: i32, %arg1: memref<64x256xf32, #tpu.memory_space<vmem>>, %arg2: memref<128x64xf32, #tpu.memory_space<vmem>>, %arg3: memref<128x1xf32, #tpu.memory_space<vmem>>, %arg4: memref<64x128xf32, #tpu.memory_space<vmem>>, %arg5: memref<64x1xf32, #tpu.memory_space<vmem>>, %arg6: memref<16x64xf32, #tpu.memory_space<vmem>>, %arg7: memref<16x1xf32, #tpu.memory_space<vmem>>, %arg8: memref<256x256xf32, #tpu.memory_space<vmem>>, %arg9: memref<16x256xf32, #tpu.memory_space<vmem>>) attributes {dimension_semantics = [#tpu.dimension_semantics<arbitrary>], iteration_bounds = array<i64: 1>, scalar_prefetch = 0 : i64, scratch_operands = 0 : i64, tpu.core_type = #tpu.core_type<tc>, window_params = [{pipeline_mode = #tpu.pipeline_mode<synchronous>, transform_indices = @transform_0, window_bounds = array<i64: 64, 256>}, {pipeline_mode = #tpu.pipeline_mode<synchronous>, transform_indices = @transform_1, window_bounds = array<i64: 128, 64>}, {pipeline_mode = #tpu.pipeline_mode<synchronous>, transform_indices = @transform_2, window_bounds = array<i64: 128, 1>}, {pipeline_mode = #tpu.pipeline_mode<synchronous>, transform_indices = @transform_3, window_bounds = array<i64: 64, 128>}, {pipeline_mode = #tpu.pipeline_mode<synchronous>, transform_indices = @transform_4, window_bounds = array<i64: 64, 1>}, {pipeline_mode = #tpu.pipeline_mode<synchronous>, transform_indices = @transform_5, window_bounds = array<i64: 16, 64>}, {pipeline_mode = #tpu.pipeline_mode<synchronous>, transform_indices = @transform_6, window_bounds = array<i64: 16, 1>}, {pipeline_mode = #tpu.pipeline_mode<synchronous>, transform_indices = @transform_7, window_bounds = array<i64: 256, 256>}, {pipeline_mode = #tpu.pipeline_mode<synchronous>, transform_indices = @transform_8, window_bounds = array<i64: 16, 256>}]} {
    %c0 = arith.constant 0 : index
    %c0_0 = arith.constant 0 : index
    %0 = vector.load %arg1[%c0, %c0_0] : memref<64x256xf32, #tpu.memory_space<vmem>>, vector<64x256xf32>
    %c0_1 = arith.constant 0 : index
    %c0_2 = arith.constant 0 : index
    %1 = vector.load %arg2[%c0_1, %c0_2] : memref<128x64xf32, #tpu.memory_space<vmem>>, vector<128x64xf32>
    %cst = arith.constant dense<0.000000e+00> : vector<128x256xf32>
    %2 = tpu.matmul %1, %0, %cst {dimension_numbers = #tpu.dot_dimension_numbers<[1], [0], [0], [1], [0, 0, 1, 1], [], []>} : vector<128x64xf32>, vector<64x256xf32>, vector<128x256xf32> -> vector<128x256xf32>
    %c0_3 = arith.constant 0 : index
    %c0_4 = arith.constant 0 : index
    %3 = vector.load %arg3[%c0_3, %c0_4] : memref<128x1xf32, #tpu.memory_space<vmem>>, vector<128x1xf32>
    %4 = vector.broadcast %3 : vector<128x1xf32> to vector<128x256xf32>
    %5 = arith.addf %2, %4 : vector<128x256xf32>
    %cst_5 = arith.constant 0.000000e+00 : f32
    %6 = vector.broadcast %cst_5 : f32 to vector<128x256xf32>
    %7 = arith.maximumf %5, %6 : vector<128x256xf32>
    %c0_6 = arith.constant 0 : index
    %c0_7 = arith.constant 0 : index
    %8 = vector.load %arg4[%c0_6, %c0_7] : memref<64x128xf32, #tpu.memory_space<vmem>>, vector<64x128xf32>
    %cst_8 = arith.constant dense<0.000000e+00> : vector<64x256xf32>
    %9 = tpu.matmul %8, %7, %cst_8 {dimension_numbers = #tpu.dot_dimension_numbers<[1], [0], [0], [1], [0, 0, 1, 1], [], []>} : vector<64x128xf32>, vector<128x256xf32>, vector<64x256xf32> -> vector<64x256xf32>
    %c0_9 = arith.constant 0 : index
    %c0_10 = arith.constant 0 : index
    %10 = vector.load %arg5[%c0_9, %c0_10] : memref<64x1xf32, #tpu.memory_space<vmem>>, vector<64x1xf32>
    %11 = vector.broadcast %10 : vector<64x1xf32> to vector<64x256xf32>
    %12 = arith.addf %9, %11 : vector<64x256xf32>
    %cst_11 = arith.constant 0.000000e+00 : f32
    %13 = vector.broadcast %cst_11 : f32 to vector<64x256xf32>
    %14 = arith.maximumf %12, %13 : vector<64x256xf32>
    %c0_12 = arith.constant 0 : index
    %c0_13 = arith.constant 0 : index
    %15 = vector.load %arg6[%c0_12, %c0_13] : memref<16x64xf32, #tpu.memory_space<vmem>>, vector<16x64xf32>
    %cst_14 = arith.constant dense<0.000000e+00> : vector<16x256xf32>
    %16 = tpu.matmul %15, %14, %cst_14 {dimension_numbers = #tpu.dot_dimension_numbers<[1], [0], [0], [1], [0, 0, 1, 1], [], []>} : vector<16x64xf32>, vector<64x256xf32>, vector<16x256xf32> -> vector<16x256xf32>
    %c0_15 = arith.constant 0 : index
    %c0_16 = arith.constant 0 : index
    %17 = vector.load %arg7[%c0_15, %c0_16] : memref<16x1xf32, #tpu.memory_space<vmem>>, vector<16x1xf32>
    %18 = vector.broadcast %17 : vector<16x1xf32> to vector<16x256xf32>
    %19 = arith.addf %16, %18 : vector<16x256xf32>
    %c0_17 = arith.constant 0 : index
    %c0_18 = arith.constant 0 : index
    %20 = vector.load %arg8[%c0_17, %c0_18] : memref<256x256xf32, #tpu.memory_space<vmem>>, vector<256x256xf32>
    %cst_19 = arith.constant 0.899999976 : f32
    %21 = vector.broadcast %cst_19 : f32 to vector<256x256xf32>
    %22 = arith.mulf %21, %20 : vector<256x256xf32>
    %cst_20 = arith.constant 1.000000e-01 : f32
    %23 = vector.broadcast %cst_20 : f32 to vector<16x256xf32>
    %24 = arith.mulf %23, %19 : vector<16x256xf32>
    %cst_21 = arith.constant dense<0.000000e+00> : vector<16x256xf32>
    %25 = tpu.matmul %19, %22, %cst_21 {dimension_numbers = #tpu.dot_dimension_numbers<[1], [0], [0], [1], [0, 0, 1, 1], [], []>} : vector<16x256xf32>, vector<256x256xf32>, vector<16x256xf32> -> vector<16x256xf32>
    %26 = arith.addf %25, %24 : vector<16x256xf32>
    %cst_22 = arith.constant dense<0.000000e+00> : vector<16x256xf32>
    %27 = tpu.matmul %26, %22, %cst_22 {dimension_numbers = #tpu.dot_dimension_numbers<[1], [0], [0], [1], [0, 0, 1, 1], [], []>} : vector<16x256xf32>, vector<256x256xf32>, vector<16x256xf32> -> vector<16x256xf32>
    %28 = arith.addf %27, %24 : vector<16x256xf32>
    %cst_23 = arith.constant dense<0.000000e+00> : vector<16x256xf32>
    %29 = tpu.matmul %28, %22, %cst_23 {dimension_numbers = #tpu.dot_dimension_numbers<[1], [0], [0], [1], [0, 0, 1, 1], [], []>} : vector<16x256xf32>, vector<256x256xf32>, vector<16x256xf32> -> vector<16x256xf32>
    %30 = arith.addf %29, %24 : vector<16x256xf32>
    %cst_24 = arith.constant dense<0.000000e+00> : vector<16x256xf32>
    %31 = tpu.matmul %30, %22, %cst_24 {dimension_numbers = #tpu.dot_dimension_numbers<[1], [0], [0], [1], [0, 0, 1, 1], [], []>} : vector<16x256xf32>, vector<256x256xf32>, vector<16x256xf32> -> vector<16x256xf32>
    %32 = arith.addf %31, %24 : vector<16x256xf32>
    %cst_25 = arith.constant dense<0.000000e+00> : vector<16x256xf32>
    %33 = tpu.matmul %32, %22, %cst_25 {dimension_numbers = #tpu.dot_dimension_numbers<[1], [0], [0], [1], [0, 0, 1, 1], [], []>} : vector<16x256xf32>, vector<256x256xf32>, vector<16x256xf32> -> vector<16x256xf32>
    %34 = arith.addf %33, %24 : vector<16x256xf32>
    %cst_26 = arith.constant dense<0.000000e+00> : vector<16x256xf32>
    %35 = tpu.matmul %34, %22, %cst_26 {dimension_numbers = #tpu.dot_dimension_numbers<[1], [0], [0], [1], [0, 0, 1, 1], [], []>} : vector<16x256xf32>, vector<256x256xf32>, vector<16x256xf32> -> vector<16x256xf32>
    %36 = arith.addf %35, %24 : vector<16x256xf32>
    %cst_27 = arith.constant dense<0.000000e+00> : vector<16x256xf32>
    %37 = tpu.matmul %36, %22, %cst_27 {dimension_numbers = #tpu.dot_dimension_numbers<[1], [0], [0], [1], [0, 0, 1, 1], [], []>} : vector<16x256xf32>, vector<256x256xf32>, vector<16x256xf32> -> vector<16x256xf32>
    %38 = arith.addf %37, %24 : vector<16x256xf32>
    %cst_28 = arith.constant dense<0.000000e+00> : vector<16x256xf32>
    %39 = tpu.matmul %38, %22, %cst_28 {dimension_numbers = #tpu.dot_dimension_numbers<[1], [0], [0], [1], [0, 0, 1, 1], [], []>} : vector<16x256xf32>, vector<256x256xf32>, vector<16x256xf32> -> vector<16x256xf32>
    %40 = arith.addf %39, %24 : vector<16x256xf32>
    %cst_29 = arith.constant dense<0.000000e+00> : vector<16x256xf32>
    %41 = tpu.matmul %40, %22, %cst_29 {dimension_numbers = #tpu.dot_dimension_numbers<[1], [0], [0], [1], [0, 0, 1, 1], [], []>} : vector<16x256xf32>, vector<256x256xf32>, vector<16x256xf32> -> vector<16x256xf32>
    %42 = arith.addf %41, %24 : vector<16x256xf32>
    %cst_30 = arith.constant dense<0.000000e+00> : vector<16x256xf32>
    %43 = tpu.matmul %42, %22, %cst_30 {dimension_numbers = #tpu.dot_dimension_numbers<[1], [0], [0], [1], [0, 0, 1, 1], [], []>} : vector<16x256xf32>, vector<256x256xf32>, vector<16x256xf32> -> vector<16x256xf32>
    %44 = arith.addf %43, %24 : vector<16x256xf32>
    %c0_31 = arith.constant 0 : index
    %c0_32 = arith.constant 0 : index
    %45 = vector.load %arg9[%c0_31, %c0_32] : memref<16x256xf32, #tpu.memory_space<vmem>>, vector<16x256xf32>
    tpu.vector_store %arg9[%c0_31, %c0_32], %44 {strides = array<i32>} : memref<16x256xf32, #tpu.memory_space<vmem>>, vector<16x256xf32>,
    return
  }
  func.func @transform_0(%arg0: i32) -> (i32, i32) {
    %c0_i32 = arith.constant 0 : i32
    %c0_i32_0 = arith.constant 0 : i32
    %c0_i32_1 = arith.constant 0 : i32
    return %c0_i32, %c0_i32_0 : i32, i32
  }
  func.func @transform_1(%arg0: i32) -> (i32, i32) {
    %c0_i32 = arith.constant 0 : i32
    %c0_i32_0 = arith.constant 0 : i32
    %c0_i32_1 = arith.constant 0 : i32
    return %c0_i32, %c0_i32_0 : i32, i32
  }
  func.func @transform_2(%arg0: i32) -> (i32, i32) {
    %c0_i32 = arith.constant 0 : i32
    %c0_i32_0 = arith.constant 0 : i32
    %c0_i32_1 = arith.constant 0 : i32
    return %c0_i32, %c0_i32_0 : i32, i32
  }
  func.func @transform_3(%arg0: i32) -> (i32, i32) {
    %c0_i32 = arith.constant 0 : i32
    %c0_i32_0 = arith.constant 0 : i32
    %c0_i32_1 = arith.constant 0 : i32
    return %c0_i32, %c0_i32_0 : i32, i32
  }
  func.func @transform_4(%arg0: i32) -> (i32, i32) {
    %c0_i32 = arith.constant 0 : i32
    %c0_i32_0 = arith.constant 0 : i32
    %c0_i32_1 = arith.constant 0 : i32
    return %c0_i32, %c0_i32_0 : i32, i32
  }
  func.func @transform_5(%arg0: i32) -> (i32, i32) {
    %c0_i32 = arith.constant 0 : i32
    %c0_i32_0 = arith.constant 0 : i32
    %c0_i32_1 = arith.constant 0 : i32
    return %c0_i32, %c0_i32_0 : i32, i32
  }
  func.func @transform_6(%arg0: i32) -> (i32, i32) {
    %c0_i32 = arith.constant 0 : i32
    %c0_i32_0 = arith.constant 0 : i32
    %c0_i32_1 = arith.constant 0 : i32
    return %c0_i32, %c0_i32_0 : i32, i32
  }
  func.func @transform_7(%arg0: i32) -> (i32, i32) {
    %c0_i32 = arith.constant 0 : i32
    %c0_i32_0 = arith.constant 0 : i32
    %c0_i32_1 = arith.constant 0 : i32
    return %c0_i32, %c0_i32_0 : i32, i32
  }
  func.func @transform_8(%arg0: i32) -> (i32, i32) {
    %c0_i32 = arith.constant 0 : i32
    %c0_i32_0 = arith.constant 0 : i32
    %c0_i32_1 = arith.constant 0 : i32
    return %c0_i32, %c0_i32_0 : i32, i32
  }
}

</mosaic_0001>

<llo_original>
// kernel: appnp_forward.1
$region0: #{appnp_forward.1}
  #allocation0 [shape = 'u32[]', space=smem, size = 0x4, offset = 0x4, fixed_abs, tag = 'smem constant byte address 0x4 - core index']
  #allocation1 [shape = 'u32[144,128]{1,0:T(1,128)}', space=vmem, size = 0x12000, scoped, tag = 'internal scratch']
  %s0 = inlined_call_operand.vmem [shape: f32[64,256], index: 0, kind: input, shape index: {}]
  %s1 = inlined_call_operand.vmem [shape: f32[128,64], index: 1, kind: input, shape index: {}]
  %s2 = inlined_call_operand.vmem [shape: f32[128,1], index: 2, kind: input, shape index: {}]
  %s3 = inlined_call_operand.vmem [shape: f32[64,128], index: 3, kind: input, shape index: {}]
  %s4 = inlined_call_operand.vmem [shape: f32[64,1], index: 4, kind: input, shape index: {}]
  %s5 = inlined_call_operand.vmem [shape: f32[16,64], index: 5, kind: input, shape index: {}]
  %s6 = inlined_call_operand.vmem [shape: f32[16,1], index: 6, kind: input, shape index: {}]
  %s7 = inlined_call_operand.hbm [shape: f32[256,256], index: 7, kind: input, shape index: {}]
  %s8 = inlined_call_operand.hbm [shape: f32[16,256], index: 8, kind: output, shape index: {}]
  %s9 = sld [smem:[#allocation0]]
  $region46: #{appnp_forward.1} parent=0
    _
  %s11 = ssub.s32 1, %s9
  %s12 = scalar_select 0, %s11, %s9
  $region1: #{appnp_forward.1} parent=0
    #allocation2 [shape = 'u8[262144]{0}', space=vmem, size = 0x40000, scoped, tag = 'input window, operand 7, single buffered']
    #allocation3 [shape = 's32[1]{0}', space=sflag, size = 0x4, scoped, tag = 'scoped memory for appnp_forward.1']
    #allocation4 [shape = 's32[1]{0}', space=sflag, size = 0x4, scoped, tag = 'scoped memory for appnp_forward.1']
    #allocation5 [shape = 'u8[16384]{0}', space=vmem, size = 0x4000, scoped, tag = 'output window, operand 0, single buffered']
    %13 = vsyncpa [#allocation3], 0
    %14 = vsyncpa [#allocation4], 0
    // Predicated region
    $region2: #{appnp_forward.1} parent=1 // pred_check
      _
    $region3: #{appnp_forward.1} parent=1 // pred_check_branch
      %16 = sbr.rel (0) target = $region5
    $region4: #{appnp_forward.1} parent=1 // pred_region
      _
    $region5: #{appnp_forward.1} parent=1 // pred_fallthru
      _
    // Predicated region
    $region6: #{appnp_forward.1} parent=1 // pred_check
      _
    $region7: #{appnp_forward.1} parent=1 // pred_check_branch
      %18 = sbr.rel (0) target = $region9
    $region8: #{appnp_forward.1} parent=1 // pred_region
      _
    $region9: #{appnp_forward.1} parent=1 // pred_fallthru
      _
    // Predicated region
    $region10: #{appnp_forward.1} parent=1 // pred_check
      _
    $region11: #{appnp_forward.1} parent=1 // pred_check_branch
      %20 = sbr.rel (0) target = $region13
    $region12: #{appnp_forward.1} parent=1 // pred_region
      _
    $region13: #{appnp_forward.1} parent=1 // pred_fallthru
      _
    // Predicated region
    $region14: #{appnp_forward.1} parent=1 // pred_check
      _
    $region15: #{appnp_forward.1} parent=1 // pred_check_branch
      %22 = sbr.rel (0) target = $region17
    $region16: #{appnp_forward.1} parent=1 // pred_region
      _
    $region17: #{appnp_forward.1} parent=1 // pred_fallthru
      _
    // Predicated region
    $region18: #{appnp_forward.1} parent=1 // pred_check
      _
    $region19: #{appnp_forward.1} parent=1 // pred_check_branch
      %24 = sbr.rel (0) target = $region21
    $region20: #{appnp_forward.1} parent=1 // pred_region
      _
    $region21: #{appnp_forward.1} parent=1 // pred_fallthru
      _
    // Predicated region
    $region22: #{appnp_forward.1} parent=1 // pred_check
      _
    $region23: #{appnp_forward.1} parent=1 // pred_check_branch
      %26 = sbr.rel (0) target = $region25
    $region24: #{appnp_forward.1} parent=1 // pred_region
      _
    $region25: #{appnp_forward.1} parent=1 // pred_fallthru
      _
    // Predicated region
    $region26: #{appnp_forward.1} parent=1 // pred_check
      _
    $region27: #{appnp_forward.1} parent=1 // pred_check_branch
      %28 = sbr.rel (0) target = $region29
    $region28: #{appnp_forward.1} parent=1 // pred_region
      _
    $region29: #{appnp_forward.1} parent=1 // pred_fallthru
      _
    // Predicated region
    $region30: #{appnp_forward.1} parent=1 // pred_check
      _
    $region31: #{appnp_forward.1} parent=1 // pred_check_branch
      %30 = sbr.rel (0) target = $region33
    $region32: #{appnp_forward.1} parent=1 // pred_region
      %s32 = ssub.s32 8192, 8192
      %33 = vsyncadd [#allocation3], %s32
      %s34 = sshll.u32 [#allocation2], 4
      %s35 = int_to_ptr.vmem [resolvable:$true] %s34
      %40 = dma.hbm_to_vmem [thread:$0]  %s7, 8192, %s35, [#allocation3], 256, 256, 16
    $region33: #{appnp_forward.1} parent=1 // pred_fallthru
      _
    // Predicated region
    $region34: #{appnp_forward.1} parent=1 // pred_check
      _
    $region35: #{appnp_forward.1} parent=1 // pred_check_branch
      %42 = sbr.rel (0) target = $region37
    $region36: #{appnp_forward.1} parent=1 // pred_region
      %43 = dma.done [#allocation3], 8192
    $region37: #{appnp_forward.1} parent=1 // pred_fallthru
      _
    %v44 = vld [vmem:[%s0] sm:$0xff]
    %v45 = vld [vmem:[%s0 + $0x8] sm:$0xff]
    %v46 = vld [vmem:[%s0 + $0x10] sm:$0xff]
    %v47 = vld [vmem:[%s0 + $0x18] sm:$0xff]
    %v48 = vld [vmem:[%s0 + $0x20] sm:$0xff]
    %v49 = vld [vmem:[%s0 + $0x28] sm:$0xff]
    %v50 = vld [vmem:[%s0 + $0x30] sm:$0xff]
    %v51 = vld [vmem:[%s0 + $0x38] sm:$0xff]
    %v52 = vld [vmem:[%s0 + $0x40] sm:$0xff]
    %v53 = vld [vmem:[%s0 + $0x48] sm:$0xff]
    %v54 = vld [vmem:[%s0 + $0x50] sm:$0xff]
    %v55 = vld [vmem:[%s0 + $0x58] sm:$0xff]
    %v56 = vld [vmem:[%s0 + $0x60] sm:$0xff]
    %v57 = vld [vmem:[%s0 + $0x68] sm:$0xff]
    %v58 = vld [vmem:[%s0 + $0x70] sm:$0xff]
    %v59 = vld [vmem:[%s0 + $0x78] sm:$0xff]
    %v60 = vld [vmem:[%s1] sm:$0xff]
    %v61 = vld [vmem:[%s1 + $0x8] sm:$0xff]
    %v62 = vld [vmem:[%s1 + $0x10] sm:$0xff]
    %v63 = vld [vmem:[%s1 + $0x18] sm:$0xff]
    %v64 = vld [vmem:[%s1 + $0x20] sm:$0xff]
    %v65 = vld [vmem:[%s1 + $0x28] sm:$0xff]
    %v66 = vld [vmem:[%s1 + $0x30] sm:$0xff]
    %v67 = vld [vmem:[%s1 + $0x38] sm:$0xff]
    %v68 = vld [vmem:[%s1 + $0x40] sm:$0xff]
    %v69 = vld [vmem:[%s1 + $0x48] sm:$0xff]
    %v70 = vld [vmem:[%s1 + $0x50] sm:$0xff]
    %v71 = vld [vmem:[%s1 + $0x58] sm:$0xff]
    %v72 = vld [vmem:[%s1 + $0x60] sm:$0xff]
    %v73 = vld [vmem:[%s1 + $0x68] sm:$0xff]
    %v74 = vld [vmem:[%s1 + $0x70] sm:$0xff]
    %v75 = vld [vmem:[%s1 + $0x78] sm:$0xff]
    %v76 = vld [vmem:[%s2] sm:$0xff]
    %v77 = vld [vmem:[%s2 + $0x8] sm:$0xff]
    %v78 = vld [vmem:[%s2 + $0x10] sm:$0xff]
    %v79 = vld [vmem:[%s2 + $0x18] sm:$0xff]
    %v80 = vld [vmem:[%s2 + $0x20] sm:$0xff]
    %v81 = vld [vmem:[%s2 + $0x28] sm:$0xff]
    %v82 = vld [vmem:[%s2 + $0x30] sm:$0xff]
    %v83 = vld [vmem:[%s2 + $0x38] sm:$0xff]
    %v84 = vld [vmem:[%s2 + $0x40] sm:$0xff]
    %v85 = vld [vmem:[%s2 + $0x48] sm:$0xff]
    %v86 = vld [vmem:[%s2 + $0x50] sm:$0xff]
    %v87 = vld [vmem:[%s2 + $0x58] sm:$0xff]
    %v88 = vld [vmem:[%s2 + $0x60] sm:$0xff]
    %v89 = vld [vmem:[%s2 + $0x68] sm:$0xff]
    %v90 = vld [vmem:[%s2 + $0x70] sm:$0xff]
    %v91 = vld [vmem:[%s2 + $0x78] sm:$0xff]
    %93 = vset.pattern.permute.xlu0 0
    %94 = vperm.xlu0 %93, %v76
    %v95 = vpop.permute.xlu0 %94
    %98 = vset.pattern.permute.xlu0 0
    %99 = vperm.xlu0 %98, %v77
    %v100 = vpop.permute.xlu0 %99
    %103 = vset.pattern.permute.xlu0 0
    %104 = vperm.xlu0 %103, %v78
    %v105 = vpop.permute.xlu0 %104
    %108 = vset.pattern.permute.xlu0 0
    %109 = vperm.xlu0 %108, %v79
    %v110 = vpop.permute.xlu0 %109
    %113 = vset.pattern.permute.xlu0 0
    %114 = vperm.xlu0 %113, %v80
    %v115 = vpop.permute.xlu0 %114
    %118 = vset.pattern.permute.xlu0 0
    %119 = vperm.xlu0 %118, %v81
    %v120 = vpop.permute.xlu0 %119
    %123 = vset.pattern.permute.xlu0 0
    %124 = vperm.xlu0 %123, %v82
    %v125 = vpop.permute.xlu0 %124
    %128 = vset.pattern.permute.xlu0 0
    %129 = vperm.xlu0 %128, %v83
    %v130 = vpop.permute.xlu0 %129
    %133 = vset.pattern.permute.xlu0 0
    %134 = vperm.xlu0 %133, %v84
    %v135 = vpop.permute.xlu0 %134
    %138 = vset.pattern.permute.xlu0 0
    %139 = vperm.xlu0 %138, %v85
    %v140 = vpop.permute.xlu0 %139
    %143 = vset.pattern.permute.xlu0 0
    %144 = vperm.xlu0 %143, %v86
    %v145 = vpop.permute.xlu0 %144
    %148 = vset.pattern.permute.xlu0 0
    %149 = vperm.xlu0 %148, %v87
    %v150 = vpop.permute.xlu0 %149
    %153 = vset.pattern.permute.xlu0 0
    %154 = vperm.xlu0 %153, %v88
    %v155 = vpop.permute.xlu0 %154
    %158 = vset.pattern.permute.xlu0 0
    %159 = vperm.xlu0 %158, %v89
    %v160 = vpop.permute.xlu0 %159
    %163 = vset.pattern.permute.xlu0 0
    %164 = vperm.xlu0 %163, %v90
    %v165 = vpop.permute.xlu0 %164
    %168 = vset.pattern.permute.xlu0 0
    %169 = vperm.xlu0 %168, %v91
    %v170 = vpop.permute.xlu0 %169
    %vm172 = vcmask 523264
    %v174 = vsel %vm172, %v60, 0
    %v177 = vsel %vm172, %v61, 0
    %v180 = vsel %vm172, %v62, 0
    %v183 = vsel %vm172, %v63, 0
    %v186 = vsel %vm172, %v64, 0
    %v189 = vsel %vm172, %v65, 0
    %v192 = vsel %vm172, %v66, 0
    %v195 = vsel %vm172, %v67, 0
    %v198 = vsel %vm172, %v68, 0
    %v201 = vsel %vm172, %v69, 0
    %v204 = vsel %vm172, %v70, 0
    %v207 = vsel %vm172, %v71, 0
    %v210 = vsel %vm172, %v72, 0
    %v213 = vsel %vm172, %v73, 0
    %v216 = vsel %vm172, %v74, 0
    %v219 = vsel %vm172, %v75, 0
    %221 = vmatprep.subr.mxu0 0.0
    %222 = vmatpush1.msra.mxu0 0.0
    %223 = vmatprep.subr.mxu0 0.0
    %224 = vmatpush1.msra.mxu0 0.0
    %225 = vmatprep.subr.mxu0 0.0
    %226 = vmatpush1.msra.mxu0 0.0
    %227 = vmatprep.subr.mxu0 0.0
    %228 = vmatpush1.msra.mxu0 0.0
    %229 = vmatprep.subr.mxu0 0.0
    %230 = vmatpush1.msra.mxu0 0.0
    %231 = vmatprep.subr.mxu0 0.0
    %232 = vmatpush1.msra.mxu0 0.0
    %233 = vmatprep.subr.mxu0 0.0
    %234 = vmatpush1.msra.mxu0 0.0
    %235 = vmatprep.subr.mxu0 0.0
    %236 = vmatpush1.msra.mxu0 0.0
    %237 = vmatprep.subr.mxu0 %v59
    %238 = vmatpush1.msra.mxu0 %v58
    %239 = vmatprep.subr.mxu0 %v57
    %240 = vmatpush1.msra.mxu0 %v56
    %241 = vmatprep.subr.mxu0 %v55
    %242 = vmatpush1.msra.mxu0 %v54
    %243 = vmatprep.subr.mxu0 %v53
    %244 = vmatpush1.msra.mxu0 %v52
    %245 = vmatprep.subr.mxu0 %v51
    %246 = vmatpush1.msra.mxu0 %v50
    %247 = vmatprep.subr.mxu0 %v49
    %248 = vmatpush1.msra.mxu0 %v48
    %249 = vmatprep.subr.mxu0 %v47
    %250 = vmatpush1.msra.mxu0 %v46
    %251 = vmatprep.subr.mxu0 %v45
    %252 = vmatpush1.msra.mxu0 %v44
    %253 = vmatprep.subr.mxu0 0.0
    %254 = vmatpush2.msra.mxu0 0.0
    %255 = vmatprep.subr.mxu0 0.0
    %256 = vmatpush2.msra.mxu0 0.0
    %257 = vmatprep.subr.mxu0 0.0
    %258 = vmatpush2.msra.mxu0 0.0
    %259 = vmatprep.subr.mxu0 0.0
    %260 = vmatpush2.msra.mxu0 0.0
    %261 = vmatprep.subr.mxu0 0.0
    %262 = vmatpush2.msra.mxu0 0.0
    %263 = vmatprep.subr.mxu0 0.0
    %264 = vmatpush2.msra.mxu0 0.0
    %265 = vmatprep.subr.mxu0 0.0
    %266 = vmatpush2.msra.mxu0 0.0
    %267 = vmatprep.subr.mxu0 0.0
    %268 = vmatpush2.msra.mxu0 0.0
    %269 = vmatprep.subr.mxu0 0.0
    %270 = vmatpush2.msra.mxu0 0.0
    %271 = vmatprep.subr.mxu0 0.0
    %272 = vmatpush2.msra.mxu0 0.0
    %273 = vmatprep.subr.mxu0 0.0
    %274 = vmatpush2.msra.mxu0 0.0
    %275 = vmatprep.subr.mxu0 0.0
    %276 = vmatpush2.msra.mxu0 0.0
    %277 = vmatprep.subr.mxu0 0.0
    %278 = vmatpush2.msra.mxu0 0.0
    %279 = vmatprep.subr.mxu0 0.0
    %280 = vmatpush2.msra.mxu0 0.0
    %281 = vmatprep.subr.mxu0 0.0
    %282 = vmatpush2.msra.mxu0 0.0
    %283 = vmatprep.subr.mxu0 0.0
    %284 = vmatpush2.msra.mxu0 0.0
    %285 = vmatprep.mubr.f32.mxu0 0.0
    %286 = vmatmul.mubr.f32.gmra.mxu0 %v174
    %v287 = vpop.f32.mrf.mxu0
    %v288 = vadd.f32 %v95, %v287
    %v289 = vpop.f32.mrf.mxu0
    %v290 = vadd.f32 %v95, %v289
    %291 = vmatprep.mubr.f32.mxu0 0.0
    %292 = vmatmul.mubr.f32.gmra.mxu0 %v177
    %v293 = vpop.f32.mrf.mxu0
    %v294 = vadd.f32 %v100, %v293
    %v295 = vpop.f32.mrf.mxu0
    %v296 = vadd.f32 %v100, %v295
    %297 = vmatprep.mubr.f32.mxu0 0.0
    %298 = vmatmul.mubr.f32.gmra.mxu0 %v180
    %v299 = vpop.f32.mrf.mxu0
    %v300 = vadd.f32 %v105, %v299
    %v301 = vpop.f32.mrf.mxu0
    %v302 = vadd.f32 %v105, %v301
    %303 = vmatprep.mubr.f32.mxu0 0.0
    %304 = vmatmul.mubr.f32.gmra.mxu0 %v183
    %v305 = vpop.f32.mrf.mxu0
    %v306 = vadd.f32 %v110, %v305
    %v307 = vpop.f32.mrf.mxu0
    %v308 = vadd.f32 %v110, %v307
    %309 = vmatprep.mubr.f32.mxu0 0.0
    %310 = vmatmul.mubr.f32.gmra.mxu0 %v186
    %v311 = vpop.f32.mrf.mxu0
    %v312 = vadd.f32 %v115, %v311
    %v313 = vpop.f32.mrf.mxu0
    %v314 = vadd.f32 %v115, %v313
    %315 = vmatprep.mubr.f32.mxu0 0.0
    %316 = vmatmul.mubr.f32.gmra.mxu0 %v189
    %v317 = vpop.f32.mrf.mxu0
    %v318 = vadd.f32 %v120, %v317
    %v319 = vpop.f32.mrf.mxu0
    %v320 = vadd.f32 %v120, %v319
    %321 = vmatprep.mubr.f32.mxu0 0.0
    %322 = vmatmul.mubr.f32.gmra.mxu0 %v192
    %v323 = vpop.f32.mrf.mxu0
    %v324 = vadd.f32 %v125, %v323
    %v325 = vpop.f32.mrf.mxu0
    %v326 = vadd.f32 %v125, %v325
    %327 = vmatprep.mubr.f32.mxu0 0.0
    %328 = vmatmul.mubr.f32.gmra.mxu0 %v195
    %v329 = vpop.f32.mrf.mxu0
    %v330 = vadd.f32 %v130, %v329
    %v331 = vpop.f32.mrf.mxu0
    %v332 = vadd.f32 %v130, %v331
    %333 = vmatprep.mubr.f32.mxu0 0.0
    %334 = vmatmul.mubr.f32.gmra.mxu0 %v198
    %v335 = vpop.f32.mrf.mxu0
    %v336 = vadd.f32 %v135, %v335
    %v337 = vpop.f32.mrf.mxu0
    %v338 = vadd.f32 %v135, %v337
    %339 = vmatprep.mubr.f32.mxu0 0.0
    %340 = vmatmul.mubr.f32.gmra.mxu0 %v201
    %v341 = vpop.f32.mrf.mxu0
    %v342 = vadd.f32 %v140, %v341
    %v343 = vpop.f32.mrf.mxu0
    %v344 = vadd.f32 %v140, %v343
    %345 = vmatprep.mubr.f32.mxu0 0.0
    %346 = vmatmul.mubr.f32.gmra.mxu0 %v204
    %v347 = vpop.f32.mrf.mxu0
    %v348 = vadd.f32 %v145, %v347
    %v349 = vpop.f32.mrf.mxu0
    %v350 = vadd.f32 %v145, %v349
    %351 = vmatprep.mubr.f32.mxu0 0.0
    %352 = vmatmul.mubr.f32.gmra.mxu0 %v207
    %v353 = vpop.f32.mrf.mxu0
    %v354 = vadd.f32 %v150, %v353
    %v355 = vpop.f32.mrf.mxu0
    %v356 = vadd.f32 %v150, %v355
    %357 = vmatprep.mubr.f32.mxu0 0.0
    %358 = vmatmul.mubr.f32.gmra.mxu0 %v210
    %v359 = vpop.f32.mrf.mxu0
    %v360 = vadd.f32 %v155, %v359
    %v361 = vpop.f32.mrf.mxu0
    %v362 = vadd.f32 %v155, %v361
    %363 = vmatprep.mubr.f32.mxu0 0.0
    %364 = vmatmul.mubr.f32.gmra.mxu0 %v213
    %v365 = vpop.f32.mrf.mxu0
    %v366 = vadd.f32 %v160, %v365
    %v367 = vpop.f32.mrf.mxu0
    %v368 = vadd.f32 %v160, %v367
    %369 = vmatprep.mubr.f32.mxu0 0.0
    %370 = vmatmul.mubr.f32.gmra.mxu0 %v216
    %v371 = vpop.f32.mrf.mxu0
    %v372 = vadd.f32 %v165, %v371
    %v373 = vpop.f32.mrf.mxu0
    %v374 = vadd.f32 %v165, %v373
    %375 = vmatprep.mubr.f32.mxu0 0.0
    %376 = vmatmul.mubr.f32.gmra.mxu0 %v219
    %v377 = vpop.f32.mrf.mxu0
    %v378 = vadd.f32 %v170, %v377
    %v379 = vpop.f32.mrf.mxu0
    %v380 = vadd.f32 %v170, %v379
    %381 = vdwg.mxu0
    %v382 = vmax.f32 %v288, 0.0
    %v383 = vmax.f32 %v290, 0.0
    %v384 = vmax.f32 %v294, 0.0
    %v385 = vmax.f32 %v296, 0.0
    %v386 = vmax.f32 %v300, 0.0
    %v387 = vmax.f32 %v302, 0.0
    %v388 = vmax.f32 %v306, 0.0
    %v389 = vmax.f32 %v308, 0.0
    %v390 = vmax.f32 %v312, 0.0
    %v391 = vmax.f32 %v314, 0.0
    %v392 = vmax.f32 %v318, 0.0
    %v393 = vmax.f32 %v320, 0.0
    %v394 = vmax.f32 %v324, 0.0
    %v395 = vmax.f32 %v326, 0.0
    %v396 = vmax.f32 %v330, 0.0
    %v397 = vmax.f32 %v332, 0.0
    %v398 = vmax.f32 %v336, 0.0
    %v399 = vmax.f32 %v338, 0.0
    %v400 = vmax.f32 %v342, 0.0
    %v401 = vmax.f32 %v344, 0.0
    %v402 = vmax.f32 %v348, 0.0
    %v403 = vmax.f32 %v350, 0.0
    %v404 = vmax.f32 %v354, 0.0
    %v405 = vmax.f32 %v356, 0.0
    %v406 = vmax.f32 %v360, 0.0
    %v407 = vmax.f32 %v362, 0.0
    %v408 = vmax.f32 %v366, 0.0
    %v409 = vmax.f32 %v368, 0.0
    %v410 = vmax.f32 %v372, 0.0
    %v411 = vmax.f32 %v374, 0.0
    %v412 = vmax.f32 %v378, 0.0
    %v413 = vmax.f32 %v380, 0.0
    %v414 = vld [vmem:[%s3] sm:$0xff]
    %v415 = vld [vmem:[%s3 + $0x8] sm:$0xff]
    %v416 = vld [vmem:[%s3 + $0x10] sm:$0xff]
    %v417 = vld [vmem:[%s3 + $0x18] sm:$0xff]
    %v418 = vld [vmem:[%s3 + $0x20] sm:$0xff]
    %v419 = vld [vmem:[%s3 + $0x28] sm:$0xff]
    %v420 = vld [vmem:[%s3 + $0x30] sm:$0xff]
    %v421 = vld [vmem:[%s3 + $0x38] sm:$0xff]
    %v422 = vld [vmem:[%s4] sm:$0xff]
    %v423 = vld [vmem:[%s4 + $0x8] sm:$0xff]
    %v424 = vld [vmem:[%s4 + $0x10] sm:$0xff]
    %v425 = vld [vmem:[%s4 + $0x18] sm:$0xff]
    %v426 = vld [vmem:[%s4 + $0x20] sm:$0xff]
    %v427 = vld [vmem:[%s4 + $0x28] sm:$0xff]
    %v428 = vld [vmem:[%s4 + $0x30] sm:$0xff]
    %v429 = vld [vmem:[%s4 + $0x38] sm:$0xff]
    %431 = vset.pattern.permute.xlu0 0
    %432 = vperm.xlu0 %431, %v422
    %v433 = vpop.permute.xlu0 %432
    %436 = vset.pattern.permute.xlu0 0
    %437 = vperm.xlu0 %436, %v423
    %v438 = vpop.permute.xlu0 %437
    %441 = vset.pattern.permute.xlu0 0
    %442 = vperm.xlu0 %441, %v424
    %v443 = vpop.permute.xlu0 %442
    %446 = vset.pattern.permute.xlu0 0
    %447 = vperm.xlu0 %446, %v425
    %v448 = vpop.permute.xlu0 %447
    %451 = vset.pattern.permute.xlu0 0
    %452 = vperm.xlu0 %451, %v426
    %v453 = vpop.permute.xlu0 %452
    %456 = vset.pattern.permute.xlu0 0
    %457 = vperm.xlu0 %456, %v427
    %v458 = vpop.permute.xlu0 %457
    %461 = vset.pattern.permute.xlu0 0
    %462 = vperm.xlu0 %461, %v428
    %v463 = vpop.permute.xlu0 %462
    %466 = vset.pattern.permute.xlu0 0
    %467 = vperm.xlu0 %466, %v429
    %v468 = vpop.permute.xlu0 %467
    %470 = vmatprep.subr.mxu0 %v413
    %471 = vmatpush1.msra.mxu0 %v412
    %472 = vmatprep.subr.mxu0 %v411
    %473 = vmatpush1.msra.mxu0 %v410
    %474 = vmatprep.subr.mxu0 %v409
    %475 = vmatpush1.msra.mxu0 %v408
    %476 = vmatprep.subr.mxu0 %v407
    %477 = vmatpush1.msra.mxu0 %v406
    %478 = vmatprep.subr.mxu0 %v405
    %479 = vmatpush1.msra.mxu0 %v404
    %480 = vmatprep.subr.mxu0 %v403
    %481 = vmatpush1.msra.mxu0 %v402
    %482 = vmatprep.subr.mxu0 %v401
    %483 = vmatpush1.msra.mxu0 %v400
    %484 = vmatprep.subr.mxu0 %v399
    %485 = vmatpush1.msra.mxu0 %v398
    %486 = vmatprep.subr.mxu0 %v397
    %487 = vmatpush1.msra.mxu0 %v396
    %488 = vmatprep.subr.mxu0 %v395
    %489 = vmatpush1.msra.mxu0 %v394
    %490 = vmatprep.subr.mxu0 %v393
    %491 = vmatpush1.msra.mxu0 %v392
    %492 = vmatprep.subr.mxu0 %v391
    %493 = vmatpush1.msra.mxu0 %v390
    %494 = vmatprep.subr.mxu0 %v389
    %495 = vmatpush1.msra.mxu0 %v388
    %496 = vmatprep.subr.mxu0 %v387
    %497 = vmatpush1.msra.mxu0 %v386
    %498 = vmatprep.subr.mxu0 %v385
    %499 = vmatpush1.msra.mxu0 %v384
    %500 = vmatprep.subr.mxu0 %v383
    %501 = vmatpush1.msra.mxu0 %v382
    %502 = vmatprep.subr.mxu0 0.0
    %503 = vmatpush2.msra.mxu0 0.0
    %504 = vmatprep.subr.mxu0 0.0
    %505 = vmatpush2.msra.mxu0 0.0
    %506 = vmatprep.subr.mxu0 0.0
    %507 = vmatpush2.msra.mxu0 0.0
    %508 = vmatprep.subr.mxu0 0.0
    %509 = vmatpush2.msra.mxu0 0.0
    %510 = vmatprep.subr.mxu0 0.0
    %511 = vmatpush2.msra.mxu0 0.0
    %512 = vmatprep.subr.mxu0 0.0
    %513 = vmatpush2.msra.mxu0 0.0
    %514 = vmatprep.subr.mxu0 0.0
    %515 = vmatpush2.msra.mxu0 0.0
    %516 = vmatprep.subr.mxu0 0.0
    %517 = vmatpush2.msra.mxu0 0.0
    %518 = vmatprep.subr.mxu0 0.0
    %519 = vmatpush2.msra.mxu0 0.0
    %520 = vmatprep.subr.mxu0 0.0
    %521 = vmatpush2.msra.mxu0 0.0
    %522 = vmatprep.subr.mxu0 0.0
    %523 = vmatpush2.msra.mxu0 0.0
    %524 = vmatprep.subr.mxu0 0.0
    %525 = vmatpush2.msra.mxu0 0.0
    %526 = vmatprep.subr.mxu0 0.0
    %527 = vmatpush2.msra.mxu0 0.0
    %528 = vmatprep.subr.mxu0 0.0
    %529 = vmatpush2.msra.mxu0 0.0
    %530 = vmatprep.subr.mxu0 0.0
    %531 = vmatpush2.msra.mxu0 0.0
    %532 = vmatprep.subr.mxu0 0.0
    %533 = vmatpush2.msra.mxu0 0.0
    %534 = vmatprep.mubr.f32.mxu0 0.0
    %535 = vmatmul.mubr.f32.gmra.mxu0 %v414
    %v536 = vpop.f32.mrf.mxu0
    %v537 = vadd.f32 %v433, %v536
    %v538 = vpop.f32.mrf.mxu0
    %v539 = vadd.f32 %v433, %v538
    %540 = vmatprep.mubr.f32.mxu0 0.0
    %541 = vmatmul.mubr.f32.gmra.mxu0 %v415
    %v542 = vpop.f32.mrf.mxu0
    %v543 = vadd.f32 %v438, %v542
    %v544 = vpop.f32.mrf.mxu0
    %v545 = vadd.f32 %v438, %v544
    %546 = vmatprep.mubr.f32.mxu0 0.0
    %547 = vmatmul.mubr.f32.gmra.mxu0 %v416
    %v548 = vpop.f32.mrf.mxu0
    %v549 = vadd.f32 %v443, %v548
    %v550 = vpop.f32.mrf.mxu0
    %v551 = vadd.f32 %v443, %v550
    %552 = vmatprep.mubr.f32.mxu0 0.0
    %553 = vmatmul.mubr.f32.gmra.mxu0 %v417
    %v554 = vpop.f32.mrf.mxu0
    %v555 = vadd.f32 %v448, %v554
    %v556 = vpop.f32.mrf.mxu0
    %v557 = vadd.f32 %v448, %v556
    %558 = vmatprep.mubr.f32.mxu0 0.0
    %559 = vmatmul.mubr.f32.gmra.mxu0 %v418
    %v560 = vpop.f32.mrf.mxu0
    %v561 = vadd.f32 %v453, %v560
    %v562 = vpop.f32.mrf.mxu0
    %v563 = vadd.f32 %v453, %v562
    %564 = vmatprep.mubr.f32.mxu0 0.0
    %565 = vmatmul.mubr.f32.gmra.mxu0 %v419
    %v566 = vpop.f32.mrf.mxu0
    %v567 = vadd.f32 %v458, %v566
    %v568 = vpop.f32.mrf.mxu0
    %v569 = vadd.f32 %v458, %v568
    %570 = vmatprep.mubr.f32.mxu0 0.0
    %571 = vmatmul.mubr.f32.gmra.mxu0 %v420
    %v572 = vpop.f32.mrf.mxu0
    %v573 = vadd.f32 %v463, %v572
    %v574 = vpop.f32.mrf.mxu0
    %v575 = vadd.f32 %v463, %v574
    %576 = vmatprep.mubr.f32.mxu0 0.0
    %577 = vmatmul.mubr.f32.gmra.mxu0 %v421
    %v578 = vpop.f32.mrf.mxu0
    %v579 = vadd.f32 %v468, %v578
    %v580 = vpop.f32.mrf.mxu0
    %v581 = vadd.f32 %v468, %v580
    %582 = vdwg.mxu0
    %v583 = vmax.f32 %v537, 0.0
    %v584 = vmax.f32 %v539, 0.0
    %v585 = vmax.f32 %v543, 0.0
    %v586 = vmax.f32 %v545, 0.0
    %v587 = vmax.f32 %v549, 0.0
    %v588 = vmax.f32 %v551, 0.0
    %v589 = vmax.f32 %v555, 0.0
    %v590 = vmax.f32 %v557, 0.0
    %v591 = vmax.f32 %v561, 0.0
    %v592 = vmax.f32 %v563, 0.0
    %v593 = vmax.f32 %v567, 0.0
    %v594 = vmax.f32 %v569, 0.0
    %v595 = vmax.f32 %v573, 0.0
    %v596 = vmax.f32 %v575, 0.0
    %v597 = vmax.f32 %v579, 0.0
    %v598 = vmax.f32 %v581, 0.0
    %v599 = vld [vmem:[%s5] sm:$0xff]
    %v600 = vld [vmem:[%s5 + $0x8] sm:$0xff]
    %v601 = vld [vmem:[%s6] sm:$0xff]
    %v602 = vld [vmem:[%s6 + $0x8] sm:$0xff]
    %604 = vset.pattern.permute.xlu0 0
    %605 = vperm.xlu0 %604, %v601
    %v606 = vpop.permute.xlu0 %605
    %609 = vset.pattern.permute.xlu0 0
    %610 = vperm.xlu0 %609, %v602
    %v611 = vpop.permute.xlu0 %610
    %v614 = vsel %vm172, %v599, 0
    %v617 = vsel %vm172, %v600, 0
    %619 = vmatprep.subr.mxu0 0.0
    %620 = vmatpush1.msra.mxu0 0.0
    %621 = vmatprep.subr.mxu0 0.0
    %622 = vmatpush1.msra.mxu0 0.0
    %623 = vmatprep.subr.mxu0 0.0
    %624 = vmatpush1.msra.mxu0 0.0
    %625 = vmatprep.subr.mxu0 0.0
    %626 = vmatpush1.msra.mxu0 0.0
    %627 = vmatprep.subr.mxu0 0.0
    %628 = vmatpush1.msra.mxu0 0.0
    %629 = vmatprep.subr.mxu0 0.0
    %630 = vmatpush1.msra.mxu0 0.0
    %631 = vmatprep.subr.mxu0 0.0
    %632 = vmatpush1.msra.mxu0 0.0
    %633 = vmatprep.subr.mxu0 0.0
    %634 = vmatpush1.msra.mxu0 0.0
    %635 = vmatprep.subr.mxu0 %v598
    %636 = vmatpush1.msra.mxu0 %v597
    %637 = vmatprep.subr.mxu0 %v596
    %638 = vmatpush1.msra.mxu0 %v595
    %639 = vmatprep.subr.mxu0 %v594
    %640 = vmatpush1.msra.mxu0 %v593
    %641 = vmatprep.subr.mxu0 %v592
    %642 = vmatpush1.msra.mxu0 %v591
    %643 = vmatprep.subr.mxu0 %v590
    %644 = vmatpush1.msra.mxu0 %v589
    %645 = vmatprep.subr.mxu0 %v588
    %646 = vmatpush1.msra.mxu0 %v587
    %647 = vmatprep.subr.mxu0 %v586
    %648 = vmatpush1.msra.mxu0 %v585
    %649 = vmatprep.subr.mxu0 %v584
    %650 = vmatpush1.msra.mxu0 %v583
    %651 = vmatprep.subr.mxu0 0.0
    %652 = vmatpush2.msra.mxu0 0.0
    %653 = vmatprep.subr.mxu0 0.0
    %654 = vmatpush2.msra.mxu0 0.0
    %655 = vmatprep.subr.mxu0 0.0
    %656 = vmatpush2.msra.mxu0 0.0
    %657 = vmatprep.subr.mxu0 0.0
    %658 = vmatpush2.msra.mxu0 0.0
    %659 = vmatprep.subr.mxu0 0.0
    %660 = vmatpush2.msra.mxu0 0.0
    %661 = vmatprep.subr.mxu0 0.0
    %662 = vmatpush2.msra.mxu0 0.0
    %663 = vmatprep.subr.mxu0 0.0
    %664 = vmatpush2.msra.mxu0 0.0
    %665 = vmatprep.subr.mxu0 0.0
    %666 = vmatpush2.msra.mxu0 0.0
    %667 = vmatprep.subr.mxu0 0.0
    %668 = vmatpush2.msra.mxu0 0.0
    %669 = vmatprep.subr.mxu0 0.0
    %670 = vmatpush2.msra.mxu0 0.0
    %671 = vmatprep.subr.mxu0 0.0
    %672 = vmatpush2.msra.mxu0 0.0
    %673 = vmatprep.subr.mxu0 0.0
    %674 = vmatpush2.msra.mxu0 0.0
    %675 = vmatprep.subr.mxu0 0.0
    %676 = vmatpush2.msra.mxu0 0.0
    %677 = vmatprep.subr.mxu0 0.0
    %678 = vmatpush2.msra.mxu0 0.0
    %679 = vmatprep.subr.mxu0 0.0
    %680 = vmatpush2.msra.mxu0 0.0
    %681 = vmatprep.subr.mxu0 0.0
    %682 = vmatpush2.msra.mxu0 0.0
    %683 = vmatprep.mubr.f32.mxu0 0.0
    %684 = vmatmul.mubr.f32.gmra.mxu0 %v614
    %v685 = vpop.f32.mrf.mxu0
    %v686 = vadd.f32 %v606, %v685
    %v687 = vpop.f32.mrf.mxu0
    %v688 = vadd.f32 %v606, %v687
    %689 = vmatprep.mubr.f32.mxu0 0.0
    %690 = vmatmul.mubr.f32.gmra.mxu0 %v617
    %v691 = vpop.f32.mrf.mxu0
    %v692 = vadd.f32 %v611, %v691
    %v693 = vpop.f32.mrf.mxu0
    %v694 = vadd.f32 %v611, %v693
    %695 = vdwg.mxu0
    %v696 = vld [vmem:[#allocation2] sm:$0xff]
    %v697 = vld [vmem:[#allocation2 + $0x8] sm:$0xff]
    %v698 = vld [vmem:[#allocation2 + $0x10] sm:$0xff]
    %v699 = vld [vmem:[#allocation2 + $0x18] sm:$0xff]
    %v700 = vld [vmem:[#allocation2 + $0x20] sm:$0xff]
    %v701 = vld [vmem:[#allocation2 + $0x28] sm:$0xff]
    %v702 = vld [vmem:[#allocation2 + $0x30] sm:$0xff]
    %v703 = vld [vmem:[#allocation2 + $0x38] sm:$0xff]
    %v704 = vld [vmem:[#allocation2 + $0x40] sm:$0xff]
    %v705 = vld [vmem:[#allocation2 + $0x48] sm:$0xff]
    %v706 = vld [vmem:[#allocation2 + $0x50] sm:$0xff]
    %v707 = vld [vmem:[#allocation2 + $0x58] sm:$0xff]
    %v708 = vld [vmem:[#allocation2 + $0x60] sm:$0xff]
    %v709 = vld [vmem:[#allocation2 + $0x68] sm:$0xff]
    %v710 = vld [vmem:[#allocation2 + $0x70] sm:$0xff]
    %v711 = vld [vmem:[#allocation2 + $0x78] sm:$0xff]
    %v712 = vld [vmem:[#allocation2 + $0x80] sm:$0xff]
    %v713 = vld [vmem:[#allocation2 + $0x88] sm:$0xff]
    %v714 = vld [vmem:[#allocation2 + $0x90] sm:$0xff]
    %v715 = vld [vmem:[#allocation2 + $0x98] sm:$0xff]
    %v716 = vld [vmem:[#allocation2 + $0xa0] sm:$0xff]
    %v717 = vld [vmem:[#allocation2 + $0xa8] sm:$0xff]
    %v718 = vld [vmem:[#allocation2 + $0xb0] sm:$0xff]
    %v719 = vld [vmem:[#allocation2 + $0xb8] sm:$0xff]
    %v720 = vld [vmem:[#allocation2 + $0xc0] sm:$0xff]
    %v721 = vld [vmem:[#allocation2 + $0xc8] sm:$0xff]
    %v722 = vld [vmem:[#allocation2 + $0xd0] sm:$0xff]
    %v723 = vld [vmem:[#allocation2 + $0xd8] sm:$0xff]
    %v724 = vld [vmem:[#allocation2 + $0xe0] sm:$0xff]
    %v725 = vld [vmem:[#allocation2 + $0xe8] sm:$0xff]
    %v726 = vld [vmem:[#allocation2 + $0xf0] sm:$0xff]
    %v727 = vld [vmem:[#allocation2 + $0xf8] sm:$0xff]
    %v728 = vld [vmem:[#allocation2 + $0x100] sm:$0xff]
    %v729 = vld [vmem:[#allocation2 + $0x108] sm:$0xff]
    %v730 = vld [vmem:[#allocation2 + $0x110] sm:$0xff]
    %v731 = vld [vmem:[#allocation2 + $0x118] sm:$0xff]
    %v732 = vld [vmem:[#allocation2 + $0x120] sm:$0xff]
    %v733 = vld [vmem:[#allocation2 + $0x128] sm:$0xff]
    %v734 = vld [vmem:[#allocation2 + $0x130] sm:$0xff]
    %v735 = vld [vmem:[#allocation2 + $0x138] sm:$0xff]
    %v736 = vld [vmem:[#allocation2 + $0x140] sm:$0xff]
    %v737 = vld [vmem:[#allocation2 + $0x148] sm:$0xff]
    %v738 = vld [vmem:[#allocation2 + $0x150] sm:$0xff]
    %v739 = vld [vmem:[#allocation2 + $0x158] sm:$0xff]
    %v740 = vld [vmem:[#allocation2 + $0x160] sm:$0xff]
    %v741 = vld [vmem:[#allocation2 + $0x168] sm:$0xff]
    %v742 = vld [vmem:[#allocation2 + $0x170] sm:$0xff]
    %v743 = vld [vmem:[#allocation2 + $0x178] sm:$0xff]
    %v744 = vld [vmem:[#allocation2 + $0x180] sm:$0xff]
    %v745 = vld [vmem:[#allocation2 + $0x188] sm:$0xff]
    %v746 = vld [vmem:[#allocation2 + $0x190] sm:$0xff]
    %v747 = vld [vmem:[#allocation2 + $0x198] sm:$0xff]
    %v748 = vld [vmem:[#allocation2 + $0x1a0] sm:$0xff]
    %v749 = vld [vmem:[#allocation2 + $0x1a8] sm:$0xff]
    %v750 = vld [vmem:[#allocation2 + $0x1b0] sm:$0xff]
    %v751 = vld [vmem:[#allocation2 + $0x1b8] sm:$0xff]
    %v752 = vld [vmem:[#allocation2 + $0x1c0] sm:$0xff]
    %v753 = vld [vmem:[#allocation2 + $0x1c8] sm:$0xff]
    %v754 = vld [vmem:[#allocation2 + $0x1d0] sm:$0xff]
    %v755 = vld [vmem:[#allocation2 + $0x1d8] sm:$0xff]
    %v756 = vld [vmem:[#allocation2 + $0x1e0] sm:$0xff]
    %v757 = vld [vmem:[#allocation2 + $0x1e8] sm:$0xff]
    %v758 = vld [vmem:[#allocation2 + $0x1f0] sm:$0xff]
    %v759 = vld [vmem:[#allocation2 + $0x1f8] sm:$0xff]
    %v760 = vmul.f32 %v696, 0.9
    %v761 = vmul.f32 %v697, 0.9
    %v762 = vmul.f32 %v698, 0.9
    %v763 = vmul.f32 %v699, 0.9
    %v764 = vmul.f32 %v700, 0.9
    %v765 = vmul.f32 %v701, 0.9
    %v766 = vmul.f32 %v702, 0.9
    %v767 = vmul.f32 %v703, 0.9
    %v768 = vmul.f32 %v704, 0.9
    %v769 = vmul.f32 %v705, 0.9
    %v770 = vmul.f32 %v706, 0.9
    %v771 = vmul.f32 %v707, 0.9
    %v772 = vmul.f32 %v708, 0.9
    %v773 = vmul.f32 %v709, 0.9
    %v774 = vmul.f32 %v710, 0.9
    %v775 = vmul.f32 %v711, 0.9
    %v776 = vmul.f32 %v712, 0.9
    %v777 = vmul.f32 %v713, 0.9
    %v778 = vmul.f32 %v714, 0.9
    %v779 = vmul.f32 %v715, 0.9
    %v780 = vmul.f32 %v716, 0.9
    %v781 = vmul.f32 %v717, 0.9
    %v782 = vmul.f32 %v718, 0.9
    %v783 = vmul.f32 %v719, 0.9
    %v784 = vmul.f32 %v720, 0.9
    %v785 = vmul.f32 %v721, 0.9
    %v786 = vmul.f32 %v722, 0.9
    %v787 = vmul.f32 %v723, 0.9
    %v788 = vmul.f32 %v724, 0.9
    %v789 = vmul.f32 %v725, 0.9
    %v790 = vmul.f32 %v726, 0.9
    %v791 = vmul.f32 %v727, 0.9
    %v792 = vmul.f32 %v728, 0.9
    %v793 = vmul.f32 %v729, 0.9
    %v794 = vmul.f32 %v730, 0.9
    %v795 = vmul.f32 %v731, 0.9
    %v796 = vmul.f32 %v732, 0.9
    %v797 = vmul.f32 %v733, 0.9
    %v798 = vmul.f32 %v734, 0.9
    %v799 = vmul.f32 %v735, 0.9
    %v800 = vmul.f32 %v736, 0.9
    %v801 = vmul.f32 %v737, 0.9
    %v802 = vmul.f32 %v738, 0.9
    %v803 = vmul.f32 %v739, 0.9
    %v804 = vmul.f32 %v740, 0.9
    %v805 = vmul.f32 %v741, 0.9
    %v806 = vmul.f32 %v742, 0.9
    %v807 = vmul.f32 %v743, 0.9
    %v808 = vmul.f32 %v744, 0.9
    %v809 = vmul.f32 %v745, 0.9
    %v810 = vmul.f32 %v746, 0.9
    %v811 = vmul.f32 %v747, 0.9
    %v812 = vmul.f32 %v748, 0.9
    %v813 = vmul.f32 %v749, 0.9
    %v814 = vmul.f32 %v750, 0.9
    %v815 = vmul.f32 %v751, 0.9
    %v816 = vmul.f32 %v752, 0.9
    %v817 = vmul.f32 %v753, 0.9
    %v818 = vmul.f32 %v754, 0.9
    %v819 = vmul.f32 %v755, 0.9
    %v820 = vmul.f32 %v756, 0.9
    %v821 = vmul.f32 %v757, 0.9
    %v822 = vmul.f32 %v758, 0.9
    %v823 = vmul.f32 %v759, 0.9
    %v824 = vmul.f32 %v686, 0.1
    %v825 = vmul.f32 %v688, 0.1
    %v826 = vmul.f32 %v692, 0.1
    %v827 = vmul.f32 %v694, 0.1
    %828 = vmatprep.subr.mxu0 %v791
    %829 = vmatpush1.msra.mxu0 %v790
    %830 = vmatprep.subr.mxu0 %v789
    %831 = vmatpush1.msra.mxu0 %v788
    %832 = vmatprep.subr.mxu0 %v787
    %833 = vmatpush1.msra.mxu0 %v786
    %834 = vmatprep.subr.mxu0 %v785
    %835 = vmatpush1.msra.mxu0 %v784
    %836 = vmatprep.subr.mxu0 %v783
    %837 = vmatpush1.msra.mxu0 %v782
    %838 = vmatprep.subr.mxu0 %v781
    %839 = vmatpush1.msra.mxu0 %v780
    %840 = vmatprep.subr.mxu0 %v779
    %841 = vmatpush1.msra.mxu0 %v778
    %842 = vmatprep.subr.mxu0 %v777
    %843 = vmatpush1.msra.mxu0 %v776
    %844 = vmatprep.subr.mxu0 %v775
    %845 = vmatpush1.msra.mxu0 %v774
    %846 = vmatprep.subr.mxu0 %v773
    %847 = vmatpush1.msra.mxu0 %v772
    %848 = vmatprep.subr.mxu0 %v771
    %849 = vmatpush1.msra.mxu0 %v770
    %850 = vmatprep.subr.mxu0 %v769
    %851 = vmatpush1.msra.mxu0 %v768
    %852 = vmatprep.subr.mxu0 %v767
    %853 = vmatpush1.msra.mxu0 %v766
    %854 = vmatprep.subr.mxu0 %v765
    %855 = vmatpush1.msra.mxu0 %v764
    %856 = vmatprep.subr.mxu0 %v763
    %857 = vmatpush1.msra.mxu0 %v762
    %858 = vmatprep.subr.mxu0 %v761
    %859 = vmatpush1.msra.mxu0 %v760
    %860 = vmatprep.subr.mxu0 %v823
    %861 = vmatpush2.msra.mxu0 %v822
    %862 = vmatprep.subr.mxu0 %v821
    %863 = vmatpush2.msra.mxu0 %v820
    %864 = vmatprep.subr.mxu0 %v819
    %865 = vmatpush2.msra.mxu0 %v818
    %866 = vmatprep.subr.mxu0 %v817
    %867 = vmatpush2.msra.mxu0 %v816
    %868 = vmatprep.subr.mxu0 %v815
    %869 = vmatpush2.msra.mxu0 %v814
    %870 = vmatprep.subr.mxu0 %v813
    %871 = vmatpush2.msra.mxu0 %v812
    %872 = vmatprep.subr.mxu0 %v811
    %873 = vmatpush2.msra.mxu0 %v810
    %874 = vmatprep.subr.mxu0 %v809
    %875 = vmatpush2.msra.mxu0 %v808
    %876 = vmatprep.subr.mxu0 %v807
    %877 = vmatpush2.msra.mxu0 %v806
    %878 = vmatprep.subr.mxu0 %v805
    %879 = vmatpush2.msra.mxu0 %v804
    %880 = vmatprep.subr.mxu0 %v803
    %881 = vmatpush2.msra.mxu0 %v802
    %882 = vmatprep.subr.mxu0 %v801
    %883 = vmatpush2.msra.mxu0 %v800
    %884 = vmatprep.subr.mxu0 %v799
    %885 = vmatpush2.msra.mxu0 %v798
    %886 = vmatprep.subr.mxu0 %v797
    %887 = vmatpush2.msra.mxu0 %v796
    %888 = vmatprep.subr.mxu0 %v795
    %889 = vmatpush2.msra.mxu0 %v794
    %890 = vmatprep.subr.mxu0 %v793
    %891 = vmatpush2.msra.mxu0 %v792
    %892 = vmatprep.mubr.f32.mxu0 %v688
    %893 = vmatmul.mubr.f32.gmra.mxu0 %v686
    %v894 = vpop.f32.mrf.mxu0
    %v895 = vadd.f32 %v824, %v894
    %v896 = vpop.f32.mrf.mxu0
    %v897 = vadd.f32 %v825, %v896
    %898 = vmatprep.mubr.f32.mxu0 %v694
    %899 = vmatmul.mubr.f32.gmra.mxu0 %v692
    %v900 = vpop.f32.mrf.mxu0
    %v901 = vadd.f32 %v826, %v900
    %v902 = vpop.f32.mrf.mxu0
    %v903 = vadd.f32 %v827, %v902
    %904 = vdwg.mxu0
    %905 = vmatprep.subr.mxu0 %v791
    %906 = vmatpush1.msra.mxu0 %v790
    %907 = vmatprep.subr.mxu0 %v789
    %908 = vmatpush1.msra.mxu0 %v788
    %909 = vmatprep.subr.mxu0 %v787
    %910 = vmatpush1.msra.mxu0 %v786
    %911 = vmatprep.subr.mxu0 %v785
    %912 = vmatpush1.msra.mxu0 %v784
    %913 = vmatprep.subr.mxu0 %v783
    %914 = vmatpush1.msra.mxu0 %v782
    %915 = vmatprep.subr.mxu0 %v781
    %916 = vmatpush1.msra.mxu0 %v780
    %917 = vmatprep.subr.mxu0 %v779
    %918 = vmatpush1.msra.mxu0 %v778
    %919 = vmatprep.subr.mxu0 %v777
    %920 = vmatpush1.msra.mxu0 %v776
    %921 = vmatprep.subr.mxu0 %v775
    %922 = vmatpush1.msra.mxu0 %v774
    %923 = vmatprep.subr.mxu0 %v773
    %924 = vmatpush1.msra.mxu0 %v772
    %925 = vmatprep.subr.mxu0 %v771
    %926 = vmatpush1.msra.mxu0 %v770
    %927 = vmatprep.subr.mxu0 %v769
    %928 = vmatpush1.msra.mxu0 %v768
    %929 = vmatprep.subr.mxu0 %v767
    %930 = vmatpush1.msra.mxu0 %v766
    %931 = vmatprep.subr.mxu0 %v765
    %932 = vmatpush1.msra.mxu0 %v764
    %933 = vmatprep.subr.mxu0 %v763
    %934 = vmatpush1.msra.mxu0 %v762
    %935 = vmatprep.subr.mxu0 %v761
    %936 = vmatpush1.msra.mxu0 %v760
    %937 = vmatprep.subr.mxu0 %v823
    %938 = vmatpush2.msra.mxu0 %v822
    %939 = vmatprep.subr.mxu0 %v821
    %940 = vmatpush2.msra.mxu0 %v820
    %941 = vmatprep.subr.mxu0 %v819
    %942 = vmatpush2.msra.mxu0 %v818
    %943 = vmatprep.subr.mxu0 %v817
    %944 = vmatpush2.msra.mxu0 %v816
    %945 = vmatprep.subr.mxu0 %v815
    %946 = vmatpush2.msra.mxu0 %v814
    %947 = vmatprep.subr.mxu0 %v813
    %948 = vmatpush2.msra.mxu0 %v812
    %949 = vmatprep.subr.mxu0 %v811
    %950 = vmatpush2.msra.mxu0 %v810
    %951 = vmatprep.subr.mxu0 %v809
    %952 = vmatpush2.msra.mxu0 %v808
    %953 = vmatprep.subr.mxu0 %v807
    %954 = vmatpush2.msra.mxu0 %v806
    %955 = vmatprep.subr.mxu0 %v805
    %956 = vmatpush2.msra.mxu0 %v804
    %957 = vmatprep.subr.mxu0 %v803
    %958 = vmatpush2.msra.mxu0 %v802
    %959 = vmatprep.subr.mxu0 %v801
    %960 = vmatpush2.msra.mxu0 %v800
    %961 = vmatprep.subr.mxu0 %v799
    %962 = vmatpush2.msra.mxu0 %v798
    %963 = vmatprep.subr.mxu0 %v797
    %964 = vmatpush2.msra.mxu0 %v796
    %965 = vmatprep.subr.mxu0 %v795
    %966 = vmatpush2.msra.mxu0 %v794
    %967 = vmatprep.subr.mxu0 %v793
    %968 = vmatpush2.msra.mxu0 %v792
    %969 = vmatprep.mubr.f32.mxu0 %v897
    %970 = vmatmul.mubr.f32.gmra.mxu0 %v895
    %v971 = vpop.f32.mrf.mxu0
    %v972 = vadd.f32 %v824, %v971
    %v973 = vpop.f32.mrf.mxu0
    %v974 = vadd.f32 %v825, %v973
    %975 = vmatprep.mubr.f32.mxu0 %v903
    %976 = vmatmul.mubr.f32.gmra.mxu0 %v901
    %v977 = vpop.f32.mrf.mxu0
    %v978 = vadd.f32 %v826, %v977
    %v979 = vpop.f32.mrf.mxu0
    %v980 = vadd.f32 %v827, %v979
    %981 = vdwg.mxu0
    %982 = vmatprep.subr.mxu0 %v791
    %983 = vmatpush1.msra.mxu0 %v790
    %984 = vmatprep.subr.mxu0 %v789
    %985 = vmatpush1.msra.mxu0 %v788
    %986 = vmatprep.subr.mxu0 %v787
    %987 = vmatpush1.msra.mxu0 %v786
    %988 = vmatprep.subr.mxu0 %v785
    %989 = vmatpush1.msra.mxu0 %v784
    %990 = vmatprep.subr.mxu0 %v783
    %991 = vmatpush1.msra.mxu0 %v782
    %992 = vmatprep.subr.mxu0 %v781
    %993 = vmatpush1.msra.mxu0 %v780
    %994 = vmatprep.subr.mxu0 %v779
    %995 = vmatpush1.msra.mxu0 %v778
    %996 = vmatprep.subr.mxu0 %v777
    %997 = vmatpush1.msra.mxu0 %v776
    %998 = vmatprep.subr.mxu0 %v775
    %999 = vmatpush1.msra.mxu0 %v774
    %1000 = vmatprep.subr.mxu0 %v773
    %1001 = vmatpush1.msra.mxu0 %v772
    %1002 = vmatprep.subr.mxu0 %v771
    %1003 = vmatpush1.msra.mxu0 %v770
    %1004 = vmatprep.subr.mxu0 %v769
    %1005 = vmatpush1.msra.mxu0 %v768
    %1006 = vmatprep.subr.mxu0 %v767
    %1007 = vmatpush1.msra.mxu0 %v766
    %1008 = vmatprep.subr.mxu0 %v765
    %1009 = vmatpush1.msra.mxu0 %v764
    %1010 = vmatprep.subr.mxu0 %v763
    %1011 = vmatpush1.msra.mxu0 %v762
    %1012 = vmatprep.subr.mxu0 %v761
    %1013 = vmatpush1.msra.mxu0 %v760
    %1014 = vmatprep.subr.mxu0 %v823
    %1015 = vmatpush2.msra.mxu0 %v822
    %1016 = vmatprep.subr.mxu0 %v821
    %1017 = vmatpush2.msra.mxu0 %v820
    %1018 = vmatprep.subr.mxu0 %v819
    %1019 = vmatpush2.msra.mxu0 %v818
    %1020 = vmatprep.subr.mxu0 %v817
    %1021 = vmatpush2.msra.mxu0 %v816
    %1022 = vmatprep.subr.mxu0 %v815
    %1023 = vmatpush2.msra.mxu0 %v814
    %1024 = vmatprep.subr.mxu0 %v813
    %1025 = vmatpush2.msra.mxu0 %v812
    %1026 = vmatprep.subr.mxu0 %v811
    %1027 = vmatpush2.msra.mxu0 %v810
    %1028 = vmatprep.subr.mxu0 %v809
    %1029 = vmatpush2.msra.mxu0 %v808
    %1030 = vmatprep.subr.mxu0 %v807
    %1031 = vmatpush2.msra.mxu0 %v806
    %1032 = vmatprep.subr.mxu0 %v805
    %1033 = vmatpush2.msra.mxu0 %v804
    %1034 = vmatprep.subr.mxu0 %v803
    %1035 = vmatpush2.msra.mxu0 %v802
    %1036 = vmatprep.subr.mxu0 %v801
    %1037 = vmatpush2.msra.mxu0 %v800
    %1038 = vmatprep.subr.mxu0 %v799
    %1039 = vmatpush2.msra.mxu0 %v798
    %1040 = vmatprep.subr.mxu0 %v797
    %1041 = vmatpush2.msra.mxu0 %v796
    %1042 = vmatprep.subr.mxu0 %v795
    %1043 = vmatpush2.msra.mxu0 %v794
    %1044 = vmatprep.subr.mxu0 %v793
    %1045 = vmatpush2.msra.mxu0 %v792
    %1046 = vmatprep.mubr.f32.mxu0 %v974
    %1047 = vmatmul.mubr.f32.gmra.mxu0 %v972
    %v1048 = vpop.f32.mrf.mxu0
    %v1049 = vadd.f32 %v824, %v1048
    %v1050 = vpop.f32.mrf.mxu0
    %v1051 = vadd.f32 %v825, %v1050
    %1052 = vmatprep.mubr.f32.mxu0 %v980
    %1053 = vmatmul.mubr.f32.gmra.mxu0 %v978
    %v1054 = vpop.f32.mrf.mxu0
    %v1055 = vadd.f32 %v826, %v1054
    %v1056 = vpop.f32.mrf.mxu0
    %v1057 = vadd.f32 %v827, %v1056
    %1058 = vdwg.mxu0
    %1059 = vmatprep.subr.mxu0 %v791
    %1060 = vmatpush1.msra.mxu0 %v790
    %1061 = vmatprep.subr.mxu0 %v789
    %1062 = vmatpush1.msra.mxu0 %v788
    %1063 = vmatprep.subr.mxu0 %v787
    %1064 = vmatpush1.msra.mxu0 %v786
    %1065 = vmatprep.subr.mxu0 %v785
    %1066 = vmatpush1.msra.mxu0 %v784
    %1067 = vmatprep.subr.mxu0 %v783
    %1068 = vmatpush1.msra.mxu0 %v782
    %1069 = vmatprep.subr.mxu0 %v781
    %1070 = vmatpush1.msra.mxu0 %v780
    %1071 = vmatprep.subr.mxu0 %v779
    %1072 = vmatpush1.msra.mxu0 %v778
    %1073 = vmatprep.subr.mxu0 %v777
    %1074 = vmatpush1.msra.mxu0 %v776
    %1075 = vmatprep.subr.mxu0 %v775
    %1076 = vmatpush1.msra.mxu0 %v774
    %1077 = vmatprep.subr.mxu0 %v773
    %1078 = vmatpush1.msra.mxu0 %v772
    %1079 = vmatprep.subr.mxu0 %v771
    %1080 = vmatpush1.msra.mxu0 %v770
    %1081 = vmatprep.subr.mxu0 %v769
    %1082 = vmatpush1.msra.mxu0 %v768
    %1083 = vmatprep.subr.mxu0 %v767
    %1084 = vmatpush1.msra.mxu0 %v766
    %1085 = vmatprep.subr.mxu0 %v765
    %1086 = vmatpush1.msra.mxu0 %v764
    %1087 = vmatprep.subr.mxu0 %v763
    %1088 = vmatpush1.msra.mxu0 %v762
    %1089 = vmatprep.subr.mxu0 %v761
    %1090 = vmatpush1.msra.mxu0 %v760
    %1091 = vmatprep.subr.mxu0 %v823
    %1092 = vmatpush2.msra.mxu0 %v822
    %1093 = vmatprep.subr.mxu0 %v821
    %1094 = vmatpush2.msra.mxu0 %v820
    %1095 = vmatprep.subr.mxu0 %v819
    %1096 = vmatpush2.msra.mxu0 %v818
    %1097 = vmatprep.subr.mxu0 %v817
    %1098 = vmatpush2.msra.mxu0 %v816
    %1099 = vmatprep.subr.mxu0 %v815
    %1100 = vmatpush2.msra.mxu0 %v814
    %1101 = vmatprep.subr.mxu0 %v813
    %1102 = vmatpush2.msra.mxu0 %v812
    %1103 = vmatprep.subr.mxu0 %v811
    %1104 = vmatpush2.msra.mxu0 %v810
    %1105 = vmatprep.subr.mxu0 %v809
    %1106 = vmatpush2.msra.mxu0 %v808
    %1107 = vmatprep.subr.mxu0 %v807
    %1108 = vmatpush2.msra.mxu0 %v806
    %1109 = vmatprep.subr.mxu0 %v805
    %1110 = vmatpush2.msra.mxu0 %v804
    %1111 = vmatprep.subr.mxu0 %v803
    %1112 = vmatpush2.msra.mxu0 %v802
    %1113 = vmatprep.subr.mxu0 %v801
    %1114 = vmatpush2.msra.mxu0 %v800
    %1115 = vmatprep.subr.mxu0 %v799
    %1116 = vmatpush2.msra.mxu0 %v798
    %1117 = vmatprep.subr.mxu0 %v797
    %1118 = vmatpush2.msra.mxu0 %v796
    %1119 = vmatprep.subr.mxu0 %v795
    %1120 = vmatpush2.msra.mxu0 %v794
    %1121 = vmatprep.subr.mxu0 %v793
    %1122 = vmatpush2.msra.mxu0 %v792
    %1123 = vmatprep.mubr.f32.mxu0 %v1051
    %1124 = vmatmul.mubr.f32.gmra.mxu0 %v1049
    %v1125 = vpop.f32.mrf.mxu0
    %v1126 = vadd.f32 %v824, %v1125
    %v1127 = vpop.f32.mrf.mxu0
    %v1128 = vadd.f32 %v825, %v1127
    %1129 = vmatprep.mubr.f32.mxu0 %v1057
    %1130 = vmatmul.mubr.f32.gmra.mxu0 %v1055
    %v1131 = vpop.f32.mrf.mxu0
    %v1132 = vadd.f32 %v826, %v1131
    %v1133 = vpop.f32.mrf.mxu0
    %v1134 = vadd.f32 %v827, %v1133
    %1135 = vdwg.mxu0
    %1136 = vmatprep.subr.mxu0 %v791
    %1137 = vmatpush1.msra.mxu0 %v790
    %1138 = vmatprep.subr.mxu0 %v789
    %1139 = vmatpush1.msra.mxu0 %v788
    %1140 = vmatprep.subr.mxu0 %v787
    %1141 = vmatpush1.msra.mxu0 %v786
    %1142 = vmatprep.subr.mxu0 %v785
    %1143 = vmatpush1.msra.mxu0 %v784
    %1144 = vmatprep.subr.mxu0 %v783
    %1145 = vmatpush1.msra.mxu0 %v782
    %1146 = vmatprep.subr.mxu0 %v781
    %1147 = vmatpush1.msra.mxu0 %v780
    %1148 = vmatprep.subr.mxu0 %v779
    %1149 = vmatpush1.msra.mxu0 %v778
    %1150 = vmatprep.subr.mxu0 %v777
    %1151 = vmatpush1.msra.mxu0 %v776
    %1152 = vmatprep.subr.mxu0 %v775
    %1153 = vmatpush1.msra.mxu0 %v774
    %1154 = vmatprep.subr.mxu0 %v773
    %1155 = vmatpush1.msra.mxu0 %v772
    %1156 = vmatprep.subr.mxu0 %v771
    %1157 = vmatpush1.msra.mxu0 %v770
    %1158 = vmatprep.subr.mxu0 %v769
    %1159 = vmatpush1.msra.mxu0 %v768
    %1160 = vmatprep.subr.mxu0 %v767
    %1161 = vmatpush1.msra.mxu0 %v766
    %1162 = vmatprep.subr.mxu0 %v765
    %1163 = vmatpush1.msra.mxu0 %v764
    %1164 = vmatprep.subr.mxu0 %v763
    %1165 = vmatpush1.msra.mxu0 %v762
    %1166 = vmatprep.subr.mxu0 %v761
    %1167 = vmatpush1.msra.mxu0 %v760
    %1168 = vmatprep.subr.mxu0 %v823
    %1169 = vmatpush2.msra.mxu0 %v822
    %1170 = vmatprep.subr.mxu0 %v821
    %1171 = vmatpush2.msra.mxu0 %v820
    %1172 = vmatprep.subr.mxu0 %v819
    %1173 = vmatpush2.msra.mxu0 %v818
    %1174 = vmatprep.subr.mxu0 %v817
    %1175 = vmatpush2.msra.mxu0 %v816
    %1176 = vmatprep.subr.mxu0 %v815
    %1177 = vmatpush2.msra.mxu0 %v814
    %1178 = vmatprep.subr.mxu0 %v813
    %1179 = vmatpush2.msra.mxu0 %v812
    %1180 = vmatprep.subr.mxu0 %v811
    %1181 = vmatpush2.msra.mxu0 %v810
    %1182 = vmatprep.subr.mxu0 %v809
    %1183 = vmatpush2.msra.mxu0 %v808
    %1184 = vmatprep.subr.mxu0 %v807
    %1185 = vmatpush2.msra.mxu0 %v806
    %1186 = vmatprep.subr.mxu0 %v805
    %1187 = vmatpush2.msra.mxu0 %v804
    %1188 = vmatprep.subr.mxu0 %v803
    %1189 = vmatpush2.msra.mxu0 %v802
    %1190 = vmatprep.subr.mxu0 %v801
    %1191 = vmatpush2.msra.mxu0 %v800
    %1192 = vmatprep.subr.mxu0 %v799
    %1193 = vmatpush2.msra.mxu0 %v798
    %1194 = vmatprep.subr.mxu0 %v797
    %1195 = vmatpush2.msra.mxu0 %v796
    %1196 = vmatprep.subr.mxu0 %v795
    %1197 = vmatpush2.msra.mxu0 %v794
    %1198 = vmatprep.subr.mxu0 %v793
    %1199 = vmatpush2.msra.mxu0 %v792
    %1200 = vmatprep.mubr.f32.mxu0 %v1128
    %1201 = vmatmul.mubr.f32.gmra.mxu0 %v1126
    %v1202 = vpop.f32.mrf.mxu0
    %v1203 = vadd.f32 %v824, %v1202
    %v1204 = vpop.f32.mrf.mxu0
    %v1205 = vadd.f32 %v825, %v1204
    %1206 = vmatprep.mubr.f32.mxu0 %v1134
    %1207 = vmatmul.mubr.f32.gmra.mxu0 %v1132
    %v1208 = vpop.f32.mrf.mxu0
    %v1209 = vadd.f32 %v826, %v1208
    %v1210 = vpop.f32.mrf.mxu0
    %v1211 = vadd.f32 %v827, %v1210
    %1212 = vdwg.mxu0
    %1213 = vmatprep.subr.mxu0 %v791
    %1214 = vmatpush1.msra.mxu0 %v790
    %1215 = vmatprep.subr.mxu0 %v789
    %1216 = vmatpush1.msra.mxu0 %v788
    %1217 = vmatprep.subr.mxu0 %v787
    %1218 = vmatpush1.msra.mxu0 %v786
    %1219 = vmatprep.subr.mxu0 %v785
    %1220 = vmatpush1.msra.mxu0 %v784
    %1221 = vmatprep.subr.mxu0 %v783
    %1222 = vmatpush1.msra.mxu0 %v782
    %1223 = vmatprep.subr.mxu0 %v781
    %1224 = vmatpush1.msra.mxu0 %v780
    %1225 = vmatprep.subr.mxu0 %v779
    %1226 = vmatpush1.msra.mxu0 %v778
    %1227 = vmatprep.subr.mxu0 %v777
    %1228 = vmatpush1.msra.mxu0 %v776
    %1229 = vmatprep.subr.mxu0 %v775
    %1230 = vmatpush1.msra.mxu0 %v774
    %1231 = vmatprep.subr.mxu0 %v773
    %1232 = vmatpush1.msra.mxu0 %v772
    %1233 = vmatprep.subr.mxu0 %v771
    %1234 = vmatpush1.msra.mxu0 %v770
    %1235 = vmatprep.subr.mxu0 %v769
    %1236 = vmatpush1.msra.mxu0 %v768
    %1237 = vmatprep.subr.mxu0 %v767
    %1238 = vmatpush1.msra.mxu0 %v766
    %1239 = vmatprep.subr.mxu0 %v765
    %1240 = vmatpush1.msra.mxu0 %v764
    %1241 = vmatprep.subr.mxu0 %v763
    %1242 = vmatpush1.msra.mxu0 %v762
    %1243 = vmatprep.subr.mxu0 %v761
    %1244 = vmatpush1.msra.mxu0 %v760
    %1245 = vmatprep.subr.mxu0 %v823
    %1246 = vmatpush2.msra.mxu0 %v822
    %1247 = vmatprep.subr.mxu0 %v821
    %1248 = vmatpush2.msra.mxu0 %v820
    %1249 = vmatprep.subr.mxu0 %v819
    %1250 = vmatpush2.msra.mxu0 %v818
    %1251 = vmatprep.subr.mxu0 %v817
    %1252 = vmatpush2.msra.mxu0 %v816
    %1253 = vmatprep.subr.mxu0 %v815
    %1254 = vmatpush2.msra.mxu0 %v814
    %1255 = vmatprep.subr.mxu0 %v813
    %1256 = vmatpush2.msra.mxu0 %v812
    %1257 = vmatprep.subr.mxu0 %v811
    %1258 = vmatpush2.msra.mxu0 %v810
    %1259 = vmatprep.subr.mxu0 %v809
    %1260 = vmatpush2.msra.mxu0 %v808
    %1261 = vmatprep.subr.mxu0 %v807
    %1262 = vmatpush2.msra.mxu0 %v806
    %1263 = vmatprep.subr.mxu0 %v805
    %1264 = vmatpush2.msra.mxu0 %v804
    %1265 = vmatprep.subr.mxu0 %v803
    %1266 = vmatpush2.msra.mxu0 %v802
    %1267 = vmatprep.subr.mxu0 %v801
    %1268 = vmatpush2.msra.mxu0 %v800
    %1269 = vmatprep.subr.mxu0 %v799
    %1270 = vmatpush2.msra.mxu0 %v798
    %1271 = vmatprep.subr.mxu0 %v797
    %1272 = vmatpush2.msra.mxu0 %v796
    %1273 = vmatprep.subr.mxu0 %v795
    %1274 = vmatpush2.msra.mxu0 %v794
    %1275 = vmatprep.subr.mxu0 %v793
    %1276 = vmatpush2.msra.mxu0 %v792
    %1277 = vmatprep.mubr.f32.mxu0 %v1205
    %1278 = vmatmul.mubr.f32.gmra.mxu0 %v1203
    %v1279 = vpop.f32.mrf.mxu0
    %v1280 = vadd.f32 %v824, %v1279
    %v1281 = vpop.f32.mrf.mxu0
    %v1282 = vadd.f32 %v825, %v1281
    %1283 = vmatprep.mubr.f32.mxu0 %v1211
    %1284 = vmatmul.mubr.f32.gmra.mxu0 %v1209
    %v1285 = vpop.f32.mrf.mxu0
    %v1286 = vadd.f32 %v826, %v1285
    %v1287 = vpop.f32.mrf.mxu0
    %v1288 = vadd.f32 %v827, %v1287
    %1289 = vdwg.mxu0
    %1290 = vmatprep.subr.mxu0 %v791
    %1291 = vmatpush1.msra.mxu0 %v790
    %1292 = vmatprep.subr.mxu0 %v789
    %1293 = vmatpush1.msra.mxu0 %v788
    %1294 = vmatprep.subr.mxu0 %v787
    %1295 = vmatpush1.msra.mxu0 %v786
    %1296 = vmatprep.subr.mxu0 %v785
    %1297 = vmatpush1.msra.mxu0 %v784
    %1298 = vmatprep.subr.mxu0 %v783
    %1299 = vmatpush1.msra.mxu0 %v782
    %1300 = vmatprep.subr.mxu0 %v781
    %1301 = vmatpush1.msra.mxu0 %v780
    %1302 = vmatprep.subr.mxu0 %v779
    %1303 = vmatpush1.msra.mxu0 %v778
    %1304 = vmatprep.subr.mxu0 %v777
    %1305 = vmatpush1.msra.mxu0 %v776
    %1306 = vmatprep.subr.mxu0 %v775
    %1307 = vmatpush1.msra.mxu0 %v774
    %1308 = vmatprep.subr.mxu0 %v773
    %1309 = vmatpush1.msra.mxu0 %v772
    %1310 = vmatprep.subr.mxu0 %v771
    %1311 = vmatpush1.msra.mxu0 %v770
    %1312 = vmatprep.subr.mxu0 %v769
    %1313 = vmatpush1.msra.mxu0 %v768
    %1314 = vmatprep.subr.mxu0 %v767
    %1315 = vmatpush1.msra.mxu0 %v766
    %1316 = vmatprep.subr.mxu0 %v765
    %1317 = vmatpush1.msra.mxu0 %v764
    %1318 = vmatprep.subr.mxu0 %v763
    %1319 = vmatpush1.msra.mxu0 %v762
    %1320 = vmatprep.subr.mxu0 %v761
    %1321 = vmatpush1.msra.mxu0 %v760
    %1322 = vmatprep.subr.mxu0 %v823
    %1323 = vmatpush2.msra.mxu0 %v822
    %1324 = vmatprep.subr.mxu0 %v821
    %1325 = vmatpush2.msra.mxu0 %v820
    %1326 = vmatprep.subr.mxu0 %v819
    %1327 = vmatpush2.msra.mxu0 %v818
    %1328 = vmatprep.subr.mxu0 %v817
    %1329 = vmatpush2.msra.mxu0 %v816
    %1330 = vmatprep.subr.mxu0 %v815
    %1331 = vmatpush2.msra.mxu0 %v814
    %1332 = vmatprep.subr.mxu0 %v813
    %1333 = vmatpush2.msra.mxu0 %v812
    %1334 = vmatprep.subr.mxu0 %v811
    %1335 = vmatpush2.msra.mxu0 %v810
    %1336 = vmatprep.subr.mxu0 %v809
    %1337 = vmatpush2.msra.mxu0 %v808
    %1338 = vmatprep.subr.mxu0 %v807
    %1339 = vmatpush2.msra.mxu0 %v806
    %1340 = vmatprep.subr.mxu0 %v805
    %1341 = vmatpush2.msra.mxu0 %v804
    %1342 = vmatprep.subr.mxu0 %v803
    %1343 = vmatpush2.msra.mxu0 %v802
    %1344 = vmatprep.subr.mxu0 %v801
    %1345 = vmatpush2.msra.mxu0 %v800
    %1346 = vmatprep.subr.mxu0 %v799
    %1347 = vmatpush2.msra.mxu0 %v798
    %1348 = vmatprep.subr.mxu0 %v797
    %1349 = vmatpush2.msra.mxu0 %v796
    %1350 = vmatprep.subr.mxu0 %v795
    %1351 = vmatpush2.msra.mxu0 %v794
    %1352 = vmatprep.subr.mxu0 %v793
    %1353 = vmatpush2.msra.mxu0 %v792
    %1354 = vmatprep.mubr.f32.mxu0 %v1282
    %1355 = vmatmul.mubr.f32.gmra.mxu0 %v1280
    %v1356 = vpop.f32.mrf.mxu0
    %v1357 = vadd.f32 %v824, %v1356
    %v1358 = vpop.f32.mrf.mxu0
    %v1359 = vadd.f32 %v825, %v1358
    %1360 = vmatprep.mubr.f32.mxu0 %v1288
    %1361 = vmatmul.mubr.f32.gmra.mxu0 %v1286
    %v1362 = vpop.f32.mrf.mxu0
    %v1363 = vadd.f32 %v826, %v1362
    %v1364 = vpop.f32.mrf.mxu0
    %v1365 = vadd.f32 %v827, %v1364
    %1366 = vdwg.mxu0
    %1367 = vmatprep.subr.mxu0 %v791
    %1368 = vmatpush1.msra.mxu0 %v790
    %1369 = vmatprep.subr.mxu0 %v789
    %1370 = vmatpush1.msra.mxu0 %v788
    %1371 = vmatprep.subr.mxu0 %v787
    %1372 = vmatpush1.msra.mxu0 %v786
    %1373 = vmatprep.subr.mxu0 %v785
    %1374 = vmatpush1.msra.mxu0 %v784
    %1375 = vmatprep.subr.mxu0 %v783
    %1376 = vmatpush1.msra.mxu0 %v782
    %1377 = vmatprep.subr.mxu0 %v781
    %1378 = vmatpush1.msra.mxu0 %v780
    %1379 = vmatprep.subr.mxu0 %v779
    %1380 = vmatpush1.msra.mxu0 %v778
    %1381 = vmatprep.subr.mxu0 %v777
    %1382 = vmatpush1.msra.mxu0 %v776
    %1383 = vmatprep.subr.mxu0 %v775
    %1384 = vmatpush1.msra.mxu0 %v774
    %1385 = vmatprep.subr.mxu0 %v773
    %1386 = vmatpush1.msra.mxu0 %v772
    %1387 = vmatprep.subr.mxu0 %v771
    %1388 = vmatpush1.msra.mxu0 %v770
    %1389 = vmatprep.subr.mxu0 %v769
    %1390 = vmatpush1.msra.mxu0 %v768
    %1391 = vmatprep.subr.mxu0 %v767
    %1392 = vmatpush1.msra.mxu0 %v766
    %1393 = vmatprep.subr.mxu0 %v765
    %1394 = vmatpush1.msra.mxu0 %v764
    %1395 = vmatprep.subr.mxu0 %v763
    %1396 = vmatpush1.msra.mxu0 %v762
    %1397 = vmatprep.subr.mxu0 %v761
    %1398 = vmatpush1.msra.mxu0 %v760
    %1399 = vmatprep.subr.mxu0 %v823
    %1400 = vmatpush2.msra.mxu0 %v822
    %1401 = vmatprep.subr.mxu0 %v821
    %1402 = vmatpush2.msra.mxu0 %v820
    %1403 = vmatprep.subr.mxu0 %v819
    %1404 = vmatpush2.msra.mxu0 %v818
    %1405 = vmatprep.subr.mxu0 %v817
    %1406 = vmatpush2.msra.mxu0 %v816
    %1407 = vmatprep.subr.mxu0 %v815
    %1408 = vmatpush2.msra.mxu0 %v814
    %1409 = vmatprep.subr.mxu0 %v813
    %1410 = vmatpush2.msra.mxu0 %v812
    %1411 = vmatprep.subr.mxu0 %v811
    %1412 = vmatpush2.msra.mxu0 %v810
    %1413 = vmatprep.subr.mxu0 %v809
    %1414 = vmatpush2.msra.mxu0 %v808
    %1415 = vmatprep.subr.mxu0 %v807
    %1416 = vmatpush2.msra.mxu0 %v806
    %1417 = vmatprep.subr.mxu0 %v805
    %1418 = vmatpush2.msra.mxu0 %v804
    %1419 = vmatprep.subr.mxu0 %v803
    %1420 = vmatpush2.msra.mxu0 %v802
    %1421 = vmatprep.subr.mxu0 %v801
    %1422 = vmatpush2.msra.mxu0 %v800
    %1423 = vmatprep.subr.mxu0 %v799
    %1424 = vmatpush2.msra.mxu0 %v798
    %1425 = vmatprep.subr.mxu0 %v797
    %1426 = vmatpush2.msra.mxu0 %v796
    %1427 = vmatprep.subr.mxu0 %v795
    %1428 = vmatpush2.msra.mxu0 %v794
    %1429 = vmatprep.subr.mxu0 %v793
    %1430 = vmatpush2.msra.mxu0 %v792
    %1431 = vmatprep.mubr.f32.mxu0 %v1359
    %1432 = vmatmul.mubr.f32.gmra.mxu0 %v1357
    %v1433 = vpop.f32.mrf.mxu0
    %v1434 = vadd.f32 %v824, %v1433
    %v1435 = vpop.f32.mrf.mxu0
    %v1436 = vadd.f32 %v825, %v1435
    %1437 = vmatprep.mubr.f32.mxu0 %v1365
    %1438 = vmatmul.mubr.f32.gmra.mxu0 %v1363
    %v1439 = vpop.f32.mrf.mxu0
    %v1440 = vadd.f32 %v826, %v1439
    %v1441 = vpop.f32.mrf.mxu0
    %v1442 = vadd.f32 %v827, %v1441
    %1443 = vdwg.mxu0
    %1444 = vmatprep.subr.mxu0 %v791
    %1445 = vmatpush1.msra.mxu0 %v790
    %1446 = vmatprep.subr.mxu0 %v789
    %1447 = vmatpush1.msra.mxu0 %v788
    %1448 = vmatprep.subr.mxu0 %v787
    %1449 = vmatpush1.msra.mxu0 %v786
    %1450 = vmatprep.subr.mxu0 %v785
    %1451 = vmatpush1.msra.mxu0 %v784
    %1452 = vmatprep.subr.mxu0 %v783
    %1453 = vmatpush1.msra.mxu0 %v782
    %1454 = vmatprep.subr.mxu0 %v781
    %1455 = vmatpush1.msra.mxu0 %v780
    %1456 = vmatprep.subr.mxu0 %v779
    %1457 = vmatpush1.msra.mxu0 %v778
    %1458 = vmatprep.subr.mxu0 %v777
    %1459 = vmatpush1.msra.mxu0 %v776
    %1460 = vmatprep.subr.mxu0 %v775
    %1461 = vmatpush1.msra.mxu0 %v774
    %1462 = vmatprep.subr.mxu0 %v773
    %1463 = vmatpush1.msra.mxu0 %v772
    %1464 = vmatprep.subr.mxu0 %v771
    %1465 = vmatpush1.msra.mxu0 %v770
    %1466 = vmatprep.subr.mxu0 %v769
    %1467 = vmatpush1.msra.mxu0 %v768
    %1468 = vmatprep.subr.mxu0 %v767
    %1469 = vmatpush1.msra.mxu0 %v766
    %1470 = vmatprep.subr.mxu0 %v765
    %1471 = vmatpush1.msra.mxu0 %v764
    %1472 = vmatprep.subr.mxu0 %v763
    %1473 = vmatpush1.msra.mxu0 %v762
    %1474 = vmatprep.subr.mxu0 %v761
    %1475 = vmatpush1.msra.mxu0 %v760
    %1476 = vmatprep.subr.mxu0 %v823
    %1477 = vmatpush2.msra.mxu0 %v822
    %1478 = vmatprep.subr.mxu0 %v821
    %1479 = vmatpush2.msra.mxu0 %v820
    %1480 = vmatprep.subr.mxu0 %v819
    %1481 = vmatpush2.msra.mxu0 %v818
    %1482 = vmatprep.subr.mxu0 %v817
    %1483 = vmatpush2.msra.mxu0 %v816
    %1484 = vmatprep.subr.mxu0 %v815
    %1485 = vmatpush2.msra.mxu0 %v814
    %1486 = vmatprep.subr.mxu0 %v813
    %1487 = vmatpush2.msra.mxu0 %v812
    %1488 = vmatprep.subr.mxu0 %v811
    %1489 = vmatpush2.msra.mxu0 %v810
    %1490 = vmatprep.subr.mxu0 %v809
    %1491 = vmatpush2.msra.mxu0 %v808
    %1492 = vmatprep.subr.mxu0 %v807
    %1493 = vmatpush2.msra.mxu0 %v806
    %1494 = vmatprep.subr.mxu0 %v805
    %1495 = vmatpush2.msra.mxu0 %v804
    %1496 = vmatprep.subr.mxu0 %v803
    %1497 = vmatpush2.msra.mxu0 %v802
    %1498 = vmatprep.subr.mxu0 %v801
    %1499 = vmatpush2.msra.mxu0 %v800
    %1500 = vmatprep.subr.mxu0 %v799
    %1501 = vmatpush2.msra.mxu0 %v798
    %1502 = vmatprep.subr.mxu0 %v797
    %1503 = vmatpush2.msra.mxu0 %v796
    %1504 = vmatprep.subr.mxu0 %v795
    %1505 = vmatpush2.msra.mxu0 %v794
    %1506 = vmatprep.subr.mxu0 %v793
    %1507 = vmatpush2.msra.mxu0 %v792
    %1508 = vmatprep.mubr.f32.mxu0 %v1436
    %1509 = vmatmul.mubr.f32.gmra.mxu0 %v1434
    %v1510 = vpop.f32.mrf.mxu0
    %v1511 = vadd.f32 %v824, %v1510
    %v1512 = vpop.f32.mrf.mxu0
    %v1513 = vadd.f32 %v825, %v1512
    %1514 = vmatprep.mubr.f32.mxu0 %v1442
    %1515 = vmatmul.mubr.f32.gmra.mxu0 %v1440
    %v1516 = vpop.f32.mrf.mxu0
    %v1517 = vadd.f32 %v826, %v1516
    %v1518 = vpop.f32.mrf.mxu0
    %v1519 = vadd.f32 %v827, %v1518
    %1520 = vdwg.mxu0
    %1521 = vmatprep.subr.mxu0 %v791
    %1522 = vmatpush1.msra.mxu0 %v790
    %1523 = vmatprep.subr.mxu0 %v789
    %1524 = vmatpush1.msra.mxu0 %v788
    %1525 = vmatprep.subr.mxu0 %v787
    %1526 = vmatpush1.msra.mxu0 %v786
    %1527 = vmatprep.subr.mxu0 %v785
    %1528 = vmatpush1.msra.mxu0 %v784
    %1529 = vmatprep.subr.mxu0 %v783
    %1530 = vmatpush1.msra.mxu0 %v782
    %1531 = vmatprep.subr.mxu0 %v781
    %1532 = vmatpush1.msra.mxu0 %v780
    %1533 = vmatprep.subr.mxu0 %v779
    %1534 = vmatpush1.msra.mxu0 %v778
    %1535 = vmatprep.subr.mxu0 %v777
    %1536 = vmatpush1.msra.mxu0 %v776
    %1537 = vmatprep.subr.mxu0 %v775
    %1538 = vmatpush1.msra.mxu0 %v774
    %1539 = vmatprep.subr.mxu0 %v773
    %1540 = vmatpush1.msra.mxu0 %v772
    %1541 = vmatprep.subr.mxu0 %v771
    %1542 = vmatpush1.msra.mxu0 %v770
    %1543 = vmatprep.subr.mxu0 %v769
    %1544 = vmatpush1.msra.mxu0 %v768
    %1545 = vmatprep.subr.mxu0 %v767
    %1546 = vmatpush1.msra.mxu0 %v766
    %1547 = vmatprep.subr.mxu0 %v765
    %1548 = vmatpush1.msra.mxu0 %v764
    %1549 = vmatprep.subr.mxu0 %v763
    %1550 = vmatpush1.msra.mxu0 %v762
    %1551 = vmatprep.subr.mxu0 %v761
    %1552 = vmatpush1.msra.mxu0 %v760
    %1553 = vmatprep.subr.mxu0 %v823
    %1554 = vmatpush2.msra.mxu0 %v822
    %1555 = vmatprep.subr.mxu0 %v821
    %1556 = vmatpush2.msra.mxu0 %v820
    %1557 = vmatprep.subr.mxu0 %v819
    %1558 = vmatpush2.msra.mxu0 %v818
    %1559 = vmatprep.subr.mxu0 %v817
    %1560 = vmatpush2.msra.mxu0 %v816
    %1561 = vmatprep.subr.mxu0 %v815
    %1562 = vmatpush2.msra.mxu0 %v814
    %1563 = vmatprep.subr.mxu0 %v813
    %1564 = vmatpush2.msra.mxu0 %v812
    %1565 = vmatprep.subr.mxu0 %v811
    %1566 = vmatpush2.msra.mxu0 %v810
    %1567 = vmatprep.subr.mxu0 %v809
    %1568 = vmatpush2.msra.mxu0 %v808
    %1569 = vmatprep.subr.mxu0 %v807
    %1570 = vmatpush2.msra.mxu0 %v806
    %1571 = vmatprep.subr.mxu0 %v805
    %1572 = vmatpush2.msra.mxu0 %v804
    %1573 = vmatprep.subr.mxu0 %v803
    %1574 = vmatpush2.msra.mxu0 %v802
    %1575 = vmatprep.subr.mxu0 %v801
    %1576 = vmatpush2.msra.mxu0 %v800
    %1577 = vmatprep.subr.mxu0 %v799
    %1578 = vmatpush2.msra.mxu0 %v798
    %1579 = vmatprep.subr.mxu0 %v797
    %1580 = vmatpush2.msra.mxu0 %v796
    %1581 = vmatprep.subr.mxu0 %v795
    %1582 = vmatpush2.msra.mxu0 %v794
    %1583 = vmatprep.subr.mxu0 %v793
    %1584 = vmatpush2.msra.mxu0 %v792
    %1585 = vmatprep.mubr.f32.mxu0 %v1513
    %1586 = vmatmul.mubr.f32.gmra.mxu0 %v1511
    %v1587 = vpop.f32.mrf.mxu0
    %v1588 = vadd.f32 %v824, %v1587
    %v1589 = vpop.f32.mrf.mxu0
    %v1590 = vadd.f32 %v825, %v1589
    %1591 = vmatprep.mubr.f32.mxu0 %v1519
    %1592 = vmatmul.mubr.f32.gmra.mxu0 %v1517
    %v1593 = vpop.f32.mrf.mxu0
    %v1594 = vadd.f32 %v826, %v1593
    %v1595 = vpop.f32.mrf.mxu0
    %v1596 = vadd.f32 %v827, %v1595
    %1597 = vdwg.mxu0
    %1598 = vst [vmem:[#allocation5] sm:$0xff] %v1588
    %1599 = vst [vmem:[#allocation5 + $0x8] sm:$0xff] %v1590
    %1600 = vst [vmem:[#allocation5 + $0x10] sm:$0xff] %v1594
    %1601 = vst [vmem:[#allocation5 + $0x18] sm:$0xff] %v1596
    // Predicated region
    $region38: #{appnp_forward.1} parent=1 // pred_check
      _
    $region39: #{appnp_forward.1} parent=1 // pred_check_branch
      %1603 = sbr.rel (0) target = $region41
    $region40: #{appnp_forward.1} parent=1 // pred_region
      %s1605 = ssub.s32 512, 512
      %1606 = vsyncadd [#allocation4], %s1605
      %s1607 = sshll.u32 [#allocation5], 4
      %s1608 = int_to_ptr.vmem [resolvable:$true] %s1607
      %1613 = dma.vmem_to_hbm [thread:$0]  %s1608, 512, %s8, [#allocation4], 256, 256, 16
    $region41: #{appnp_forward.1} parent=1 // pred_fallthru
      _
    // Predicated region
    $region42: #{appnp_forward.1} parent=1 // pred_check
      _
    $region43: #{appnp_forward.1} parent=1 // pred_check_branch
      %1615 = sbr.rel (0) target = $region45
    $region44: #{appnp_forward.1} parent=1 // pred_region
      %1616 = dma.done [#allocation4], 512
    $region45: #{appnp_forward.1} parent=1 // pred_fallthru
      _
    %1617 = vsyncpa [#allocation3], 1
    %1618 = vsyncpa [#allocation4], 1

</llo_original>
